<compile_context>
chip_gen: v5e
topology: v5e:2x2
jax: 0.10.0
libtpu: 0.0.40
codegen_flags: <defaults>
</compile_context>

<pallas_src>
import functools

import jax
import jax.numpy as jnp
from jax import lax
from jax.experimental import pallas as pl
from jax.experimental.pallas import tpu as pltpu

BN_EPS = 1e-5
F_PAD = 128    # lane-dense feature width (every layer width padded to this)
ROW_PAD = 8    # sublane alignment for the batch/node axis


def _round_up(x, m):
    return (x + m - 1) // m * m


# ----------------------------------------------------------------------------
# Fused Pallas kernel: all layers, activation resident in VMEM
# ----------------------------------------------------------------------------
def _fused_mlp_kernel(x_ref, w_ref, b_ref, g_ref, bt_ref, o_ref, *,
                      layer_cfg, n_actual):
    """Whole encoder -> MLP -> decoder stack in one kernel.

    x_ref : (N_pad, F_PAD)      zero-padded input
    w_ref : (L, F_PAD, F_PAD)   zero-padded weights
    b_ref : (L, 1, F_PAD)       zero-padded biases
    g_ref : (L, 1, F_PAD)       BN gamma (ones where unused)
    bt_ref: (L, 1, F_PAD)       BN beta  (zeros where unused)
    o_ref : (N_pad, F_PAD)      padded output (real data in [:n, :f_out_last])
    layer_cfg : static tuple of (use_bn, use_relu) per layer
    n_actual  : static number of real (un-padded) rows, for exact BN stats
    """
    n_pad = x_ref.shape[0]
    # Mask padded rows so BatchNorm statistics match the un-padded batch.
    row_ids = lax.broadcasted_iota(jnp.int32, (n_pad, 1), 0)
    row_mask = (row_ids < n_actual).astype(jnp.float32)
    inv_n = 1.0 / float(n_actual)

    y = x_ref[...]
    for l, (use_bn, use_relu) in enumerate(layer_cfg):
        y = jnp.dot(y, w_ref[l], preferred_element_type=jnp.float32) + b_ref[l]
        if use_bn:
            # BatchNorm1d training mode: batch mean and *biased* variance.
            mean = jnp.sum(y * row_mask, axis=0, keepdims=True) * inv_n
            cent = y - mean
            var = jnp.sum(cent * cent * row_mask, axis=0, keepdims=True) * inv_n
            y = cent * lax.rsqrt(var + BN_EPS) * g_ref[l] + bt_ref[l]
        if use_relu:
            y = jnp.maximum(y, 0.0)
    o_ref[...] = y


def nn_forward(x, enc_params, mid_params, dec_params, bn_bool):
    """Full NN forward (encoder MLP -> BN-MLP -> decoder MLP) as one kernel."""
    # Flatten the three MLPs into one layer list with static per-layer config.
    layers = []

    def add_mlp(params, batch_norm):
        n_layers = len(params)
        for i, p in enumerate(params):
            last = i == n_layers - 1
            layers.append((p, batch_norm and not last, not last))

    add_mlp(enc_params, False)
    add_mlp(mid_params, bn_bool)
    add_mlp(dec_params, False)

    n, f_in = x.shape
    f_out_final = layers[-1][0]["w"].shape[1]
    n_pad = _round_up(n, ROW_PAD)
    num_layers = len(layers)

    # Lane-dense, zero-padded parameter stacks (weights are tiny).
    x_p = jnp.zeros((n_pad, F_PAD), jnp.float32).at[:n, :f_in].set(x)
    w_p = jnp.zeros((num_layers, F_PAD, F_PAD), jnp.float32)
    b_p = jnp.zeros((num_layers, 1, F_PAD), jnp.float32)
    g_p = jnp.ones((num_layers, 1, F_PAD), jnp.float32)
    bt_p = jnp.zeros((num_layers, 1, F_PAD), jnp.float32)
    cfg = []
    for l, (p, use_bn, use_relu) in enumerate(layers):
        fi, fo = p["w"].shape
        w_p = w_p.at[l, :fi, :fo].set(p["w"])
        b_p = b_p.at[l, 0, :fo].set(p["b"])
        if use_bn:
            g_p = g_p.at[l, 0, :fo].set(p["gamma"])
            bt_p = bt_p.at[l, 0, :fo].set(p["beta"])
        cfg.append((use_bn, use_relu))
    cfg = tuple(cfg)

    kernel = functools.partial(_fused_mlp_kernel, layer_cfg=cfg, n_actual=n)

    # Explicit VMEM budget (activations + params + headroom) so v7x's smaller
    # scoped default is never an issue once N grows.
    act_bytes = n_pad * F_PAD * 4
    param_bytes = num_layers * (F_PAD * F_PAD + 3 * F_PAD) * 4
    vmem_limit = int(min(max(6 * act_bytes + 2 * param_bytes, 4 << 20), 48 << 20))

    cost = pl.CostEstimate(
        flops=2 * n_pad * F_PAD * F_PAD * num_layers,
        transcendentals=F_PAD * sum(1 for c in cfg if c[0]),
        bytes_accessed=2 * act_bytes + param_bytes,
    )

    out = pl.pallas_call(
        kernel,
        out_shape=jax.ShapeDtypeStruct((n_pad, F_PAD), jnp.float32),
        compiler_params=pltpu.CompilerParams(vmem_limit_bytes=vmem_limit),
        cost_estimate=cost,
    )(x_p, w_p, b_p, g_p, bt_p)
    return out[:n, :f_out_final]


# ----------------------------------------------------------------------------
# Parameter init (torch_geometric-style MLP: Linear -> [BN] -> ReLU, plain last)
# ----------------------------------------------------------------------------
def init_mlp(key, channels, batch_norm):
    params = []
    for i in range(len(channels) - 1):
        key, kw, kb = jax.random.split(key, 3)
        f_in, f_out = channels[i], channels[i + 1]
        scale = 1.0 / jnp.sqrt(jnp.float32(f_in))
        layer = {
            "w": jax.random.uniform(kw, (f_in, f_out), jnp.float32, -scale, scale),
            "b": jax.random.uniform(kb, (f_out,), jnp.float32, -scale, scale),
        }
        if batch_norm and i < len(channels) - 2:
            layer["gamma"] = jnp.ones((f_out,), jnp.float32)
            layer["beta"] = jnp.zeros((f_out,), jnp.float32)
        params.append(layer)
    return params


# ----------------------------------------------------------------------------
# pure-jnp reference (for correctness check)
# ----------------------------------------------------------------------------
def _ref_mlp(x, params, batch_norm):
    n_layers = len(params)
    for i, p in enumerate(params):
        y = x @ p["w"] + p["b"][None, :]
        if i < n_layers - 1:
            if batch_norm:
                mean = jnp.mean(y, axis=0, keepdims=True)
                var = jnp.mean((y - mean) ** 2, axis=0, keepdims=True)
                y = (y - mean) * lax.rsqrt(var + BN_EPS)
                y = y * p["gamma"][None, :] + p["beta"][None, :]
            y = jnp.maximum(y, 0.0)
        x = y
    return x


def _ref_forward(x, enc_p, mid_p, dec_p, bn_bool):
    z = _ref_mlp(x, enc_p, False)
    z = _ref_mlp(z, mid_p, bn_bool)
    z = _ref_mlp(z, dec_p, False)
    return z


if __name__ == "__main__":
    hparams = {
        "nb_hidden_layers": 2,
        "size_hidden_layers": 32,
        "bn_bool": True,
        "encoder": [5, 32, 8],   # dim_enc = 8
        "decoder": [8, 32, 4],
    }
    dim_enc = hparams["encoder"][-1]
    mid_channels = (
        [dim_enc]
        + [hparams["size_hidden_layers"]] * hparams["nb_hidden_layers"]
        + [dim_enc]
    )

    key = jax.random.PRNGKey(0)
    key, ke, km, kd, kx = jax.random.split(key, 5)
    enc_params = init_mlp(ke, hparams["encoder"], batch_norm=False)
    mid_params = init_mlp(km, mid_channels, batch_norm=hparams["bn_bool"])
    dec_params = init_mlp(kd, hparams["decoder"], batch_norm=False)

    # data.x: 203 graph nodes (deliberately not a multiple of 8), 5 features
    n_nodes = 203
    x = jax.random.normal(kx, (n_nodes, hparams["encoder"][0]), jnp.float32)

    out = nn_forward(x, enc_params, mid_params, dec_params, hparams["bn_bool"])
    out = jax.block_until_ready(out)

    ref = _ref_forward(x, enc_params, mid_params, dec_params, hparams["bn_bool"])
    assert out.shape == (n_nodes, hparams["decoder"][-1])
    assert jnp.allclose(out, ref, rtol=1e-4, atol=1e-4), "mismatch vs jnp reference"

    print("KERNEL_OK")
</pallas_src>

<mosaic_0001>
module attributes {stable_mosaic.version = 11 : i64} {
  func.func @_fused_mlp_kernel(%arg0: memref<208x128xf32, #tpu.memory_space<vmem>>, %arg1: memref<7x128x128xf32, #tpu.memory_space<vmem>>, %arg2: memref<7x1x128xf32, #tpu.memory_space<vmem>>, %arg3: memref<7x1x128xf32, #tpu.memory_space<vmem>>, %arg4: memref<7x1x128xf32, #tpu.memory_space<vmem>>, %arg5: memref<208x128xf32, #tpu.memory_space<vmem>>) attributes {dimension_semantics = [], scalar_prefetch = 0 : i64, scratch_operands = 0 : i64, tpu.core_type = #tpu.core_type<tc>} {
    %0 = tpu.iota {dimensions = array<i32: 0>} : vector<208x1xi32>
    %c203_i32 = arith.constant 203 : i32
    %1 = vector.broadcast %c203_i32 : i32 to vector<208x1xi32>
    %2 = arith.cmpi slt, %0, %1 : vector<208x1xi32>
    %3 = arith.extui %2 : vector<208x1xi1> to vector<208x1xi32>
    %4 = arith.sitofp %3 : vector<208x1xi32> to vector<208x1xf32>
    %c0 = arith.constant 0 : index
    %c0_0 = arith.constant 0 : index
    %5 = vector.load %arg0[%c0, %c0_0] : memref<208x128xf32, #tpu.memory_space<vmem>>, vector<208x128xf32>
    %c0_1 = arith.constant 0 : index
    %c0_2 = arith.constant 0 : index
    %c0_3 = arith.constant 0 : index
    %6 = vector.load %arg1[%c0_1, %c0_2, %c0_3] : memref<7x128x128xf32, #tpu.memory_space<vmem>>, vector<1x128x128xf32>
    %7 = vector.shape_cast %6 : vector<1x128x128xf32> to vector<128x128xf32>
    %cst = arith.constant dense<0.000000e+00> : vector<208x128xf32>
    %8 = tpu.matmul %5, %7, %cst {dimension_numbers = #tpu.dot_dimension_numbers<[1], [0], [0], [1], [0, 0, 1, 1], [], []>} : vector<208x128xf32>, vector<128x128xf32>, vector<208x128xf32> -> vector<208x128xf32>
    %c0_4 = arith.constant 0 : index
    %c0_5 = arith.constant 0 : index
    %c0_6 = arith.constant 0 : index
    %9 = vector.load %arg2[%c0_4, %c0_5, %c0_6] : memref<7x1x128xf32, #tpu.memory_space<vmem>>, vector<1x1x128xf32>
    %10 = vector.shape_cast %9 : vector<1x1x128xf32> to vector<1x128xf32>
    %11 = vector.broadcast %10 : vector<1x128xf32> to vector<208x128xf32>
    %12 = arith.addf %8, %11 : vector<208x128xf32>
    %cst_7 = arith.constant 0.000000e+00 : f32
    %13 = vector.broadcast %cst_7 : f32 to vector<208x128xf32>
    %14 = arith.maximumf %12, %13 : vector<208x128xf32>
    %c1 = arith.constant 1 : index
    %c0_8 = arith.constant 0 : index
    %c0_9 = arith.constant 0 : index
    %15 = vector.load %arg1[%c1, %c0_8, %c0_9] : memref<7x128x128xf32, #tpu.memory_space<vmem>>, vector<1x128x128xf32>
    %16 = vector.shape_cast %15 : vector<1x128x128xf32> to vector<128x128xf32>
    %cst_10 = arith.constant dense<0.000000e+00> : vector<208x128xf32>
    %17 = tpu.matmul %14, %16, %cst_10 {dimension_numbers = #tpu.dot_dimension_numbers<[1], [0], [0], [1], [0, 0, 1, 1], [], []>} : vector<208x128xf32>, vector<128x128xf32>, vector<208x128xf32> -> vector<208x128xf32>
    %c1_11 = arith.constant 1 : index
    %c0_12 = arith.constant 0 : index
    %c0_13 = arith.constant 0 : index
    %18 = vector.load %arg2[%c1_11, %c0_12, %c0_13] : memref<7x1x128xf32, #tpu.memory_space<vmem>>, vector<1x1x128xf32>
    %19 = vector.shape_cast %18 : vector<1x1x128xf32> to vector<1x128xf32>
    %20 = vector.broadcast %19 : vector<1x128xf32> to vector<208x128xf32>
    %21 = arith.addf %17, %20 : vector<208x128xf32>
    %c2 = arith.constant 2 : index
    %c0_14 = arith.constant 0 : index
    %c0_15 = arith.constant 0 : index
    %22 = vector.load %arg1[%c2, %c0_14, %c0_15] : memref<7x128x128xf32, #tpu.memory_space<vmem>>, vector<1x128x128xf32>
    %23 = vector.shape_cast %22 : vector<1x128x128xf32> to vector<128x128xf32>
    %cst_16 = arith.constant dense<0.000000e+00> : vector<208x128xf32>
    %24 = tpu.matmul %21, %23, %cst_16 {dimension_numbers = #tpu.dot_dimension_numbers<[1], [0], [0], [1], [0, 0, 1, 1], [], []>} : vector<208x128xf32>, vector<128x128xf32>, vector<208x128xf32> -> vector<208x128xf32>
    %c2_17 = arith.constant 2 : index
    %c0_18 = arith.constant 0 : index
    %c0_19 = arith.constant 0 : index
    %25 = vector.load %arg2[%c2_17, %c0_18, %c0_19] : memref<7x1x128xf32, #tpu.memory_space<vmem>>, vector<1x1x128xf32>
    %26 = vector.shape_cast %25 : vector<1x1x128xf32> to vector<1x128xf32>
    %27 = vector.broadcast %26 : vector<1x128xf32> to vector<208x128xf32>
    %28 = arith.addf %24, %27 : vector<208x128xf32>
    %29 = vector.broadcast %4 : vector<208x1xf32> to vector<208x128xf32>
    %30 = arith.mulf %28, %29 : vector<208x128xf32>
    %cst_20 = arith.constant dense<0.000000e+00> : vector<128xf32>
    %31 = vector.multi_reduction <add>, %30, %cst_20 [0] : vector<208x128xf32> to vector<128xf32>
    %32 = vector.shape_cast %31 : vector<128xf32> to vector<1x128xf32>
    %cst_21 = arith.constant 0.00492610829 : f32
    %33 = vector.broadcast %cst_21 : f32 to vector<1x128xf32>
    %34 = arith.mulf %32, %33 : vector<1x128xf32>
    %35 = vector.broadcast %34 : vector<1x128xf32> to vector<208x128xf32>
    %36 = arith.subf %28, %35 : vector<208x128xf32>
    %37 = arith.mulf %36, %36 : vector<208x128xf32>
    %38 = vector.broadcast %4 : vector<208x1xf32> to vector<208x128xf32>
    %39 = arith.mulf %37, %38 : vector<208x128xf32>
    %cst_22 = arith.constant dense<0.000000e+00> : vector<128xf32>
    %40 = vector.multi_reduction <add>, %39, %cst_22 [0] : vector<208x128xf32> to vector<128xf32>
    %41 = vector.shape_cast %40 : vector<128xf32> to vector<1x128xf32>
    %cst_23 = arith.constant 0.00492610829 : f32
    %42 = vector.broadcast %cst_23 : f32 to vector<1x128xf32>
    %43 = arith.mulf %41, %42 : vector<1x128xf32>
    %cst_24 = arith.constant 9.99999974E-6 : f32
    %44 = vector.broadcast %cst_24 : f32 to vector<1x128xf32>
    %45 = arith.addf %43, %44 : vector<1x128xf32>
    %46 = math.rsqrt %45 : vector<1x128xf32>
    %47 = vector.broadcast %46 : vector<1x128xf32> to vector<208x128xf32>
    %48 = arith.mulf %36, %47 : vector<208x128xf32>
    %c2_25 = arith.constant 2 : index
    %c0_26 = arith.constant 0 : index
    %c0_27 = arith.constant 0 : index
    %49 = vector.load %arg3[%c2_25, %c0_26, %c0_27] : memref<7x1x128xf32, #tpu.memory_space<vmem>>, vector<1x1x128xf32>
    %50 = vector.shape_cast %49 : vector<1x1x128xf32> to vector<1x128xf32>
    %51 = vector.broadcast %50 : vector<1x128xf32> to vector<208x128xf32>
    %52 = arith.mulf %48, %51 : vector<208x128xf32>
    %c2_28 = arith.constant 2 : index
    %c0_29 = arith.constant 0 : index
    %c0_30 = arith.constant 0 : index
    %53 = vector.load %arg4[%c2_28, %c0_29, %c0_30] : memref<7x1x128xf32, #tpu.memory_space<vmem>>, vector<1x1x128xf32>
    %54 = vector.shape_cast %53 : vector<1x1x128xf32> to vector<1x128xf32>
    %55 = vector.broadcast %54 : vector<1x128xf32> to vector<208x128xf32>
    %56 = arith.addf %52, %55 : vector<208x128xf32>
    %cst_31 = arith.constant 0.000000e+00 : f32
    %57 = vector.broadcast %cst_31 : f32 to vector<208x128xf32>
    %58 = arith.maximumf %56, %57 : vector<208x128xf32>
    %c3 = arith.constant 3 : index
    %c0_32 = arith.constant 0 : index
    %c0_33 = arith.constant 0 : index
    %59 = vector.load %arg1[%c3, %c0_32, %c0_33] : memref<7x128x128xf32, #tpu.memory_space<vmem>>, vector<1x128x128xf32>
    %60 = vector.shape_cast %59 : vector<1x128x128xf32> to vector<128x128xf32>
    %cst_34 = arith.constant dense<0.000000e+00> : vector<208x128xf32>
    %61 = tpu.matmul %58, %60, %cst_34 {dimension_numbers = #tpu.dot_dimension_numbers<[1], [0], [0], [1], [0, 0, 1, 1], [], []>} : vector<208x128xf32>, vector<128x128xf32>, vector<208x128xf32> -> vector<208x128xf32>
    %c3_35 = arith.constant 3 : index
    %c0_36 = arith.constant 0 : index
    %c0_37 = arith.constant 0 : index
    %62 = vector.load %arg2[%c3_35, %c0_36, %c0_37] : memref<7x1x128xf32, #tpu.memory_space<vmem>>, vector<1x1x128xf32>
    %63 = vector.shape_cast %62 : vector<1x1x128xf32> to vector<1x128xf32>
    %64 = vector.broadcast %63 : vector<1x128xf32> to vector<208x128xf32>
    %65 = arith.addf %61, %64 : vector<208x128xf32>
    %66 = vector.broadcast %4 : vector<208x1xf32> to vector<208x128xf32>
    %67 = arith.mulf %65, %66 : vector<208x128xf32>
    %cst_38 = arith.constant dense<0.000000e+00> : vector<128xf32>
    %68 = vector.multi_reduction <add>, %67, %cst_38 [0] : vector<208x128xf32> to vector<128xf32>
    %69 = vector.shape_cast %68 : vector<128xf32> to vector<1x128xf32>
    %cst_39 = arith.constant 0.00492610829 : f32
    %70 = vector.broadcast %cst_39 : f32 to vector<1x128xf32>
    %71 = arith.mulf %69, %70 : vector<1x128xf32>
    %72 = vector.broadcast %71 : vector<1x128xf32> to vector<208x128xf32>
    %73 = arith.subf %65, %72 : vector<208x128xf32>
    %74 = arith.mulf %73, %73 : vector<208x128xf32>
    %75 = vector.broadcast %4 : vector<208x1xf32> to vector<208x128xf32>
    %76 = arith.mulf %74, %75 : vector<208x128xf32>
    %cst_40 = arith.constant dense<0.000000e+00> : vector<128xf32>
    %77 = vector.multi_reduction <add>, %76, %cst_40 [0] : vector<208x128xf32> to vector<128xf32>
    %78 = vector.shape_cast %77 : vector<128xf32> to vector<1x128xf32>
    %cst_41 = arith.constant 0.00492610829 : f32
    %79 = vector.broadcast %cst_41 : f32 to vector<1x128xf32>
    %80 = arith.mulf %78, %79 : vector<1x128xf32>
    %cst_42 = arith.constant 9.99999974E-6 : f32
    %81 = vector.broadcast %cst_42 : f32 to vector<1x128xf32>
    %82 = arith.addf %80, %81 : vector<1x128xf32>
    %83 = math.rsqrt %82 : vector<1x128xf32>
    %84 = vector.broadcast %83 : vector<1x128xf32> to vector<208x128xf32>
    %85 = arith.mulf %73, %84 : vector<208x128xf32>
    %c3_43 = arith.constant 3 : index
    %c0_44 = arith.constant 0 : index
    %c0_45 = arith.constant 0 : index
    %86 = vector.load %arg3[%c3_43, %c0_44, %c0_45] : memref<7x1x128xf32, #tpu.memory_space<vmem>>, vector<1x1x128xf32>
    %87 = vector.shape_cast %86 : vector<1x1x128xf32> to vector<1x128xf32>
    %88 = vector.broadcast %87 : vector<1x128xf32> to vector<208x128xf32>
    %89 = arith.mulf %85, %88 : vector<208x128xf32>
    %c3_46 = arith.constant 3 : index
    %c0_47 = arith.constant 0 : index
    %c0_48 = arith.constant 0 : index
    %90 = vector.load %arg4[%c3_46, %c0_47, %c0_48] : memref<7x1x128xf32, #tpu.memory_space<vmem>>, vector<1x1x128xf32>
    %91 = vector.shape_cast %90 : vector<1x1x128xf32> to vector<1x128xf32>
    %92 = vector.broadcast %91 : vector<1x128xf32> to vector<208x128xf32>
    %93 = arith.addf %89, %92 : vector<208x128xf32>
    %cst_49 = arith.constant 0.000000e+00 : f32
    %94 = vector.broadcast %cst_49 : f32 to vector<208x128xf32>
    %95 = arith.maximumf %93, %94 : vector<208x128xf32>
    %c4 = arith.constant 4 : index
    %c0_50 = arith.constant 0 : index
    %c0_51 = arith.constant 0 : index
    %96 = vector.load %arg1[%c4, %c0_50, %c0_51] : memref<7x128x128xf32, #tpu.memory_space<vmem>>, vector<1x128x128xf32>
    %97 = vector.shape_cast %96 : vector<1x128x128xf32> to vector<128x128xf32>
    %cst_52 = arith.constant dense<0.000000e+00> : vector<208x128xf32>
    %98 = tpu.matmul %95, %97, %cst_52 {dimension_numbers = #tpu.dot_dimension_numbers<[1], [0], [0], [1], [0, 0, 1, 1], [], []>} : vector<208x128xf32>, vector<128x128xf32>, vector<208x128xf32> -> vector<208x128xf32>
    %c4_53 = arith.constant 4 : index
    %c0_54 = arith.constant 0 : index
    %c0_55 = arith.constant 0 : index
    %99 = vector.load %arg2[%c4_53, %c0_54, %c0_55] : memref<7x1x128xf32, #tpu.memory_space<vmem>>, vector<1x1x128xf32>
    %100 = vector.shape_cast %99 : vector<1x1x128xf32> to vector<1x128xf32>
    %101 = vector.broadcast %100 : vector<1x128xf32> to vector<208x128xf32>
    %102 = arith.addf %98, %101 : vector<208x128xf32>
    %c5 = arith.constant 5 : index
    %c0_56 = arith.constant 0 : index
    %c0_57 = arith.constant 0 : index
    %103 = vector.load %arg1[%c5, %c0_56, %c0_57] : memref<7x128x128xf32, #tpu.memory_space<vmem>>, vector<1x128x128xf32>
    %104 = vector.shape_cast %103 : vector<1x128x128xf32> to vector<128x128xf32>
    %cst_58 = arith.constant dense<0.000000e+00> : vector<208x128xf32>
    %105 = tpu.matmul %102, %104, %cst_58 {dimension_numbers = #tpu.dot_dimension_numbers<[1], [0], [0], [1], [0, 0, 1, 1], [], []>} : vector<208x128xf32>, vector<128x128xf32>, vector<208x128xf32> -> vector<208x128xf32>
    %c5_59 = arith.constant 5 : index
    %c0_60 = arith.constant 0 : index
    %c0_61 = arith.constant 0 : index
    %106 = vector.load %arg2[%c5_59, %c0_60, %c0_61] : memref<7x1x128xf32, #tpu.memory_space<vmem>>, vector<1x1x128xf32>
    %107 = vector.shape_cast %106 : vector<1x1x128xf32> to vector<1x128xf32>
    %108 = vector.broadcast %107 : vector<1x128xf32> to vector<208x128xf32>
    %109 = arith.addf %105, %108 : vector<208x128xf32>
    %cst_62 = arith.constant 0.000000e+00 : f32
    %110 = vector.broadcast %cst_62 : f32 to vector<208x128xf32>
    %111 = arith.maximumf %109, %110 : vector<208x128xf32>
    %c6 = arith.constant 6 : index
    %c0_63 = arith.constant 0 : index
    %c0_64 = arith.constant 0 : index
    %112 = vector.load %arg1[%c6, %c0_63, %c0_64] : memref<7x128x128xf32, #tpu.memory_space<vmem>>, vector<1x128x128xf32>
    %113 = vector.shape_cast %112 : vector<1x128x128xf32> to vector<128x128xf32>
    %cst_65 = arith.constant dense<0.000000e+00> : vector<208x128xf32>
    %114 = tpu.matmul %111, %113, %cst_65 {dimension_numbers = #tpu.dot_dimension_numbers<[1], [0], [0], [1], [0, 0, 1, 1], [], []>} : vector<208x128xf32>, vector<128x128xf32>, vector<208x128xf32> -> vector<208x128xf32>
    %c6_66 = arith.constant 6 : index
    %c0_67 = arith.constant 0 : index
    %c0_68 = arith.constant 0 : index
    %115 = vector.load %arg2[%c6_66, %c0_67, %c0_68] : memref<7x1x128xf32, #tpu.memory_space<vmem>>, vector<1x1x128xf32>
    %116 = vector.shape_cast %115 : vector<1x1x128xf32> to vector<1x128xf32>
    %117 = vector.broadcast %116 : vector<1x128xf32> to vector<208x128xf32>
    %118 = arith.addf %114, %117 : vector<208x128xf32>
    %c0_69 = arith.constant 0 : index
    %c0_70 = arith.constant 0 : index
    %119 = vector.load %arg5[%c0_69, %c0_70] : memref<208x128xf32, #tpu.memory_space<vmem>>, vector<208x128xf32>
    tpu.vector_store %arg5[%c0_69, %c0_70], %118 {strides = array<i32>} : memref<208x128xf32, #tpu.memory_space<vmem>>, vector<208x128xf32>,
    return
  }
}

</mosaic_0001>

<llo_original>
// kernel: tpu_custom_call.1
$region0: #{tpu_custom_call.1}
  #allocation0 [shape = 'u32[]', space=smem, size = 0x4, offset = 0x4, fixed_abs, tag = 'smem constant byte address 0x4 - core index']
  #allocation1 [shape = 'u32[72,128]{1,0:T(1,128)}', space=vmem, size = 0x9000, scoped, tag = 'internal scratch']
  %s0 = inlined_call_operand.hbm [shape: f32[208,128], index: 0, kind: input, shape index: {}]
  %s1 = inlined_call_operand.hbm [shape: f32[7,128,128], index: 1, kind: input, shape index: {}]
  %s2 = inlined_call_operand.hbm [shape: f32[7,1,128], index: 2, kind: input, shape index: {}]
  %s3 = inlined_call_operand.hbm [shape: f32[7,1,128], index: 3, kind: input, shape index: {}]
  %s4 = inlined_call_operand.hbm [shape: f32[7,1,128], index: 4, kind: input, shape index: {}]
  %s5 = inlined_call_operand.hbm [shape: f32[208,128], index: 5, kind: output, shape index: {}]
  %s6 = sld [smem:[#allocation0]]
  $region50: #{tpu_custom_call.1} parent=0
    _
  %s8 = ssub.s32 1, %s6
  %s9 = scalar_select 0, %s8, %s6
  $region1: #{tpu_custom_call.1} parent=0
    #allocation2 [shape = 'u8[106496]{0}', space=vmem, size = 0x1a000, scoped, tag = 'input window, operand 0, single buffered']
    #allocation3 [shape = 's32[1]{0}', space=sflag, size = 0x4, scoped, tag = 'scoped memory for tpu_custom_call.1']
    #allocation4 [shape = 's32[1]{0}', space=sflag, size = 0x4, scoped, tag = 'scoped memory for tpu_custom_call.1']
    #allocation5 [shape = 'u8[458752]{0}', space=vmem, size = 0x70000, scoped, tag = 'input window, operand 1, single buffered']
    #allocation6 [shape = 's32[1]{0}', space=sflag, size = 0x4, scoped, tag = 'scoped memory for tpu_custom_call.1']
    #allocation7 [shape = 'u8[3584]{0}', space=vmem, size = 0x1000, scoped, tag = 'input window, operand 2, single buffered']
    #allocation8 [shape = 'u8[3584]{0}', space=vmem, size = 0x1000, scoped, tag = 'input window, operand 3, single buffered']
    #allocation9 [shape = 's32[1]{0}', space=sflag, size = 0x4, scoped, tag = 'scoped memory for tpu_custom_call.1']
    #allocation10 [shape = 'u8[3584]{0}', space=vmem, size = 0x1000, scoped, tag = 'input window, operand 4, single buffered']
    #allocation11 [shape = 'u8[106496]{0}', space=vmem, size = 0x1a000, scoped, tag = 'output window, operand 0, single buffered']
    %10 = vsyncpa [#allocation3], 0
    %11 = vsyncpa [#allocation6], 0
    %12 = vsyncpa [#allocation9], 0
    %13 = vsyncpa [#allocation4], 0
    // Predicated region
    $region2: #{tpu_custom_call.1} parent=1 // pred_check
      _
    $region3: #{tpu_custom_call.1} parent=1 // pred_check_branch
      %15 = sbr.rel (0) target = $region5
    $region4: #{tpu_custom_call.1} parent=1 // pred_region
      %17 = vsyncadd [#allocation3], 0
      %s18 = sshll.u32 %s0, 4
      %s19 = int_to_ptr.hbm [resolvable:$true] %s18
      %s20 = sshll.u32 [#allocation2], 4
      %s21 = int_to_ptr.vmem [resolvable:$true] %s20
      %26 = dma.hbm_to_vmem [thread:$0]  %s19, 3328, %s21, [#allocation3], 128, 128, 8
    $region5: #{tpu_custom_call.1} parent=1 // pred_fallthru
      _
    // Predicated region
    $region6: #{tpu_custom_call.1} parent=1 // pred_check
      _
    $region7: #{tpu_custom_call.1} parent=1 // pred_check_branch
      %28 = sbr.rel (0) target = $region9
    $region8: #{tpu_custom_call.1} parent=1 // pred_region
      %30 = vsyncadd [#allocation6], 0
      %s31 = sshll.u32 %s1, 4
      %s32 = int_to_ptr.hbm [resolvable:$true] %s31
      %s33 = sshll.u32 [#allocation5], 4
      %s34 = int_to_ptr.vmem [resolvable:$true] %s33
      %39 = dma.hbm_to_vmem [thread:$0]  %s32, 14336, %s34, [#allocation6], 128, 128, 8
    $region9: #{tpu_custom_call.1} parent=1 // pred_fallthru
      _
    // Predicated region
    $region10: #{tpu_custom_call.1} parent=1 // pred_check
      _
    $region11: #{tpu_custom_call.1} parent=1 // pred_check_branch
      %41 = sbr.rel (0) target = $region13
    $region12: #{tpu_custom_call.1} parent=1 // pred_region
      %43 = vsyncadd [#allocation6], 0
      %s44 = sshll.u32 %s2, 4
      %s45 = int_to_ptr.hbm [resolvable:$true] %s44
      %s46 = sshll.u32 [#allocation7], 4
      %s47 = int_to_ptr.vmem [resolvable:$true] %s46
      %52 = dma.hbm_to_vmem [thread:$0]  %s45, 112, %s47, [#allocation6], 16, 16, 1
    $region13: #{tpu_custom_call.1} parent=1 // pred_fallthru
      _
    // Predicated region
    $region14: #{tpu_custom_call.1} parent=1 // pred_check
      _
    $region15: #{tpu_custom_call.1} parent=1 // pred_check_branch
      %54 = sbr.rel (0) target = $region17
    $region16: #{tpu_custom_call.1} parent=1 // pred_region
      %56 = vsyncadd [#allocation9], 0
      %s57 = sshll.u32 %s3, 4
      %s58 = int_to_ptr.hbm [resolvable:$true] %s57
      %s59 = sshll.u32 [#allocation8], 4
      %s60 = int_to_ptr.vmem [resolvable:$true] %s59
      %65 = dma.hbm_to_vmem [thread:$0]  %s58, 112, %s60, [#allocation9], 16, 16, 1
    $region17: #{tpu_custom_call.1} parent=1 // pred_fallthru
      _
    // Predicated region
    $region18: #{tpu_custom_call.1} parent=1 // pred_check
      _
    $region19: #{tpu_custom_call.1} parent=1 // pred_check_branch
      %67 = sbr.rel (0) target = $region21
    $region20: #{tpu_custom_call.1} parent=1 // pred_region
      %69 = vsyncadd [#allocation9], 0
      %s70 = sshll.u32 %s4, 4
      %s71 = int_to_ptr.hbm [resolvable:$true] %s70
      %s72 = sshll.u32 [#allocation10], 4
      %s73 = int_to_ptr.vmem [resolvable:$true] %s72
      %78 = dma.hbm_to_vmem [thread:$0]  %s71, 112, %s73, [#allocation9], 16, 16, 1
    $region21: #{tpu_custom_call.1} parent=1 // pred_fallthru
      _
    // Predicated region
    $region22: #{tpu_custom_call.1} parent=1 // pred_check
      _
    $region23: #{tpu_custom_call.1} parent=1 // pred_check_branch
      %80 = sbr.rel (0) target = $region25
    $region24: #{tpu_custom_call.1} parent=1 // pred_region
      %82 = dma.done [#allocation3], 3328
    $region25: #{tpu_custom_call.1} parent=1 // pred_fallthru
      _
    // Predicated region
    $region26: #{tpu_custom_call.1} parent=1 // pred_check
      _
    $region27: #{tpu_custom_call.1} parent=1 // pred_check_branch
      %84 = sbr.rel (0) target = $region29
    $region28: #{tpu_custom_call.1} parent=1 // pred_region
      %86 = dma.done [#allocation6], 14336
    $region29: #{tpu_custom_call.1} parent=1 // pred_fallthru
      _
    // Predicated region
    $region30: #{tpu_custom_call.1} parent=1 // pred_check
      _
    $region31: #{tpu_custom_call.1} parent=1 // pred_check_branch
      %88 = sbr.rel (0) target = $region33
    $region32: #{tpu_custom_call.1} parent=1 // pred_region
      %90 = dma.done [#allocation6], 112
    $region33: #{tpu_custom_call.1} parent=1 // pred_fallthru
      _
    // Predicated region
    $region34: #{tpu_custom_call.1} parent=1 // pred_check
      _
    $region35: #{tpu_custom_call.1} parent=1 // pred_check_branch
      %92 = sbr.rel (0) target = $region37
    $region36: #{tpu_custom_call.1} parent=1 // pred_region
      %94 = dma.done [#allocation9], 112
    $region37: #{tpu_custom_call.1} parent=1 // pred_fallthru
      _
    // Predicated region
    $region38: #{tpu_custom_call.1} parent=1 // pred_check
      _
    $region39: #{tpu_custom_call.1} parent=1 // pred_check_branch
      %96 = sbr.rel (0) target = $region41
    $region40: #{tpu_custom_call.1} parent=1 // pred_region
      %98 = dma.done [#allocation9], 112
    $region41: #{tpu_custom_call.1} parent=1 // pred_fallthru
      _
    %v99 = vlaneseq
    %v100 = vshrl.u32 %v99, 7
    %v101 = vadd.s32 %v100, 8
    %v102 = vadd.s32 %v100, 16
    %v103 = vadd.s32 %v100, 24
    %v104 = vadd.s32 %v100, 32
    %v105 = vadd.s32 %v100, 40
    %v106 = vadd.s32 %v100, 48
    %v107 = vadd.s32 %v100, 56
    %v108 = vadd.s32 %v100, 64
    %v109 = vadd.s32 %v100, 72
    %v110 = vadd.s32 %v100, 80
    %v111 = vadd.s32 %v100, 88
    %v112 = vadd.s32 %v100, 96
    %v113 = vadd.s32 %v100, 104
    %v114 = vadd.s32 %v100, 112
    %v115 = vadd.s32 %v100, 120
    %v116 = vadd.s32 %v100, 128
    %v117 = vadd.s32 %v100, 136
    %v118 = vadd.s32 %v100, 144
    %v119 = vadd.s32 %v100, 152
    %v120 = vadd.s32 %v100, 160
    %v121 = vadd.s32 %v100, 168
    %v122 = vadd.s32 %v100, 176
    %v123 = vadd.s32 %v100, 184
    %v124 = vadd.s32 %v100, 192
    %v125 = vadd.s32 %v100, 200
    %vm126 = vcmp.lt.s32.totalorder %v100, 203
    %vm127 = vcmp.lt.s32.totalorder %v101, 203
    %vm128 = vcmp.lt.s32.totalorder %v102, 203
    %vm129 = vcmp.lt.s32.totalorder %v103, 203
    %vm130 = vcmp.lt.s32.totalorder %v104, 203
    %vm131 = vcmp.lt.s32.totalorder %v105, 203
    %vm132 = vcmp.lt.s32.totalorder %v106, 203
    %vm133 = vcmp.lt.s32.totalorder %v107, 203
    %vm134 = vcmp.lt.s32.totalorder %v108, 203
    %vm135 = vcmp.lt.s32.totalorder %v109, 203
    %vm136 = vcmp.lt.s32.totalorder %v110, 203
    %vm137 = vcmp.lt.s32.totalorder %v111, 203
    %vm138 = vcmp.lt.s32.totalorder %v112, 203
    %vm139 = vcmp.lt.s32.totalorder %v113, 203
    %vm140 = vcmp.lt.s32.totalorder %v114, 203
    %vm141 = vcmp.lt.s32.totalorder %v115, 203
    %vm142 = vcmp.lt.s32.totalorder %v116, 203
    %vm143 = vcmp.lt.s32.totalorder %v117, 203
    %vm144 = vcmp.lt.s32.totalorder %v118, 203
    %vm145 = vcmp.lt.s32.totalorder %v119, 203
    %vm146 = vcmp.lt.s32.totalorder %v120, 203
    %vm147 = vcmp.lt.s32.totalorder %v121, 203
    %vm148 = vcmp.lt.s32.totalorder %v122, 203
    %vm149 = vcmp.lt.s32.totalorder %v123, 203
    %vm150 = vcmp.lt.s32.totalorder %v124, 203
    %vm151 = vcmp.lt.s32.totalorder %v125, 203
    %v152 = vsel %vm126, 1, 0
    %v153 = vsel %vm127, 1, 0
    %v154 = vsel %vm128, 1, 0
    %v155 = vsel %vm129, 1, 0
    %v156 = vsel %vm130, 1, 0
    %v157 = vsel %vm131, 1, 0
    %v158 = vsel %vm132, 1, 0
    %v159 = vsel %vm133, 1, 0
    %v160 = vsel %vm134, 1, 0
    %v161 = vsel %vm135, 1, 0
    %v162 = vsel %vm136, 1, 0
    %v163 = vsel %vm137, 1, 0
    %v164 = vsel %vm138, 1, 0
    %v165 = vsel %vm139, 1, 0
    %v166 = vsel %vm140, 1, 0
    %v167 = vsel %vm141, 1, 0
    %v168 = vsel %vm142, 1, 0
    %v169 = vsel %vm143, 1, 0
    %v170 = vsel %vm144, 1, 0
    %v171 = vsel %vm145, 1, 0
    %v172 = vsel %vm146, 1, 0
    %v173 = vsel %vm147, 1, 0
    %v174 = vsel %vm148, 1, 0
    %v175 = vsel %vm149, 1, 0
    %v176 = vsel %vm150, 1, 0
    %v177 = vsel %vm151, 1, 0
    %v178 = vcvt.s32.f32 %v152
    %v179 = vcvt.s32.f32 %v153
    %v180 = vcvt.s32.f32 %v154
    %v181 = vcvt.s32.f32 %v155
    %v182 = vcvt.s32.f32 %v156
    %v183 = vcvt.s32.f32 %v157
    %v184 = vcvt.s32.f32 %v158
    %v185 = vcvt.s32.f32 %v159
    %v186 = vcvt.s32.f32 %v160
    %v187 = vcvt.s32.f32 %v161
    %v188 = vcvt.s32.f32 %v162
    %v189 = vcvt.s32.f32 %v163
    %v190 = vcvt.s32.f32 %v164
    %v191 = vcvt.s32.f32 %v165
    %v192 = vcvt.s32.f32 %v166
    %v193 = vcvt.s32.f32 %v167
    %v194 = vcvt.s32.f32 %v168
    %v195 = vcvt.s32.f32 %v169
    %v196 = vcvt.s32.f32 %v170
    %v197 = vcvt.s32.f32 %v171
    %v198 = vcvt.s32.f32 %v172
    %v199 = vcvt.s32.f32 %v173
    %v200 = vcvt.s32.f32 %v174
    %v201 = vcvt.s32.f32 %v175
    %v202 = vcvt.s32.f32 %v176
    %v203 = vcvt.s32.f32 %v177
    %v204 = vld [vmem:[#allocation2] sm:$0xff]
    %v205 = vld [vmem:[#allocation2 + $0x8] sm:$0xff]
    %v206 = vld [vmem:[#allocation2 + $0x10] sm:$0xff]
    %v207 = vld [vmem:[#allocation2 + $0x18] sm:$0xff]
    %v208 = vld [vmem:[#allocation2 + $0x20] sm:$0xff]
    %v209 = vld [vmem:[#allocation2 + $0x28] sm:$0xff]
    %v210 = vld [vmem:[#allocation2 + $0x30] sm:$0xff]
    %v211 = vld [vmem:[#allocation2 + $0x38] sm:$0xff]
    %v212 = vld [vmem:[#allocation2 + $0x40] sm:$0xff]
    %v213 = vld [vmem:[#allocation2 + $0x48] sm:$0xff]
    %v214 = vld [vmem:[#allocation2 + $0x50] sm:$0xff]
    %v215 = vld [vmem:[#allocation2 + $0x58] sm:$0xff]
    %v216 = vld [vmem:[#allocation2 + $0x60] sm:$0xff]
    %v217 = vld [vmem:[#allocation2 + $0x68] sm:$0xff]
    %v218 = vld [vmem:[#allocation2 + $0x70] sm:$0xff]
    %v219 = vld [vmem:[#allocation2 + $0x78] sm:$0xff]
    %v220 = vld [vmem:[#allocation2 + $0x80] sm:$0xff]
    %v221 = vld [vmem:[#allocation2 + $0x88] sm:$0xff]
    %v222 = vld [vmem:[#allocation2 + $0x90] sm:$0xff]
    %v223 = vld [vmem:[#allocation2 + $0x98] sm:$0xff]
    %v224 = vld [vmem:[#allocation2 + $0xa0] sm:$0xff]
    %v225 = vld [vmem:[#allocation2 + $0xa8] sm:$0xff]
    %v226 = vld [vmem:[#allocation2 + $0xb0] sm:$0xff]
    %v227 = vld [vmem:[#allocation2 + $0xb8] sm:$0xff]
    %v228 = vld [vmem:[#allocation2 + $0xc0] sm:$0xff]
    %v229 = vld [vmem:[#allocation2 + $0xc8] sm:$0xff]
    %v230 = vld [vmem:[#allocation5] sm:$0xff]
    %v231 = vld [vmem:[#allocation5 + $0x8] sm:$0xff]
    %v232 = vld [vmem:[#allocation5 + $0x10] sm:$0xff]
    %v233 = vld [vmem:[#allocation5 + $0x18] sm:$0xff]
    %v234 = vld [vmem:[#allocation5 + $0x20] sm:$0xff]
    %v235 = vld [vmem:[#allocation5 + $0x28] sm:$0xff]
    %v236 = vld [vmem:[#allocation5 + $0x30] sm:$0xff]
    %v237 = vld [vmem:[#allocation5 + $0x38] sm:$0xff]
    %v238 = vld [vmem:[#allocation5 + $0x40] sm:$0xff]
    %v239 = vld [vmem:[#allocation5 + $0x48] sm:$0xff]
    %v240 = vld [vmem:[#allocation5 + $0x50] sm:$0xff]
    %v241 = vld [vmem:[#allocation5 + $0x58] sm:$0xff]
    %v242 = vld [vmem:[#allocation5 + $0x60] sm:$0xff]
    %v243 = vld [vmem:[#allocation5 + $0x68] sm:$0xff]
    %v244 = vld [vmem:[#allocation5 + $0x70] sm:$0xff]
    %v245 = vld [vmem:[#allocation5 + $0x78] sm:$0xff]
    %v246 = vld [vmem:[#allocation7] sm:$0x1]
    %v248 = vperm.slane %v246, 0
    %250 = vmatpush.msra.mxu0 %v245
    %251 = vmatpush.msra.mxu0 %v244
    %252 = vmatpush.msra.mxu0 %v243
    %253 = vmatpush.msra.mxu0 %v242
    %254 = vmatpush.msra.mxu0 %v241
    %255 = vmatpush.msra.mxu0 %v240
    %256 = vmatpush.msra.mxu0 %v239
    %257 = vmatpush.msra.mxu0 %v238
    %258 = vmatpush.msra.mxu0 %v237
    %259 = vmatpush.msra.mxu0 %v236
    %260 = vmatpush.msra.mxu0 %v235
    %261 = vmatpush.msra.mxu0 %v234
    %262 = vmatpush.msra.mxu0 %v233
    %263 = vmatpush.msra.mxu0 %v232
    %264 = vmatpush.msra.mxu0 %v231
    %265 = vmatpush.msra.mxu0 %v230
    %266 = vmatmul.f32.gmra.mxu0 %v204
    %v267 = vpop.f32.mrf.mxu0
    %v268 = vadd.f32 %v248, %v267
    %269 = vmatmul.f32.gmra.mxu0 %v205
    %v270 = vpop.f32.mrf.mxu0
    %v271 = vadd.f32 %v248, %v270
    %272 = vmatmul.f32.gmra.mxu0 %v206
    %v273 = vpop.f32.mrf.mxu0
    %v274 = vadd.f32 %v248, %v273
    %275 = vmatmul.f32.gmra.mxu0 %v207
    %v276 = vpop.f32.mrf.mxu0
    %v277 = vadd.f32 %v248, %v276
    %278 = vmatmul.f32.gmra.mxu0 %v208
    %v279 = vpop.f32.mrf.mxu0
    %v280 = vadd.f32 %v248, %v279
    %281 = vmatmul.f32.gmra.mxu0 %v209
    %v282 = vpop.f32.mrf.mxu0
    %v283 = vadd.f32 %v248, %v282
    %284 = vmatmul.f32.gmra.mxu0 %v210
    %v285 = vpop.f32.mrf.mxu0
    %v286 = vadd.f32 %v248, %v285
    %287 = vmatmul.f32.gmra.mxu0 %v211
    %v288 = vpop.f32.mrf.mxu0
    %v289 = vadd.f32 %v248, %v288
    %290 = vmatmul.f32.gmra.mxu0 %v212
    %v291 = vpop.f32.mrf.mxu0
    %v292 = vadd.f32 %v248, %v291
    %293 = vmatmul.f32.gmra.mxu0 %v213
    %v294 = vpop.f32.mrf.mxu0
    %v295 = vadd.f32 %v248, %v294
    %296 = vmatmul.f32.gmra.mxu0 %v214
    %v297 = vpop.f32.mrf.mxu0
    %v298 = vadd.f32 %v248, %v297
    %299 = vmatmul.f32.gmra.mxu0 %v215
    %v300 = vpop.f32.mrf.mxu0
    %v301 = vadd.f32 %v248, %v300
    %302 = vmatmul.f32.gmra.mxu0 %v216
    %v303 = vpop.f32.mrf.mxu0
    %v304 = vadd.f32 %v248, %v303
    %305 = vmatmul.f32.gmra.mxu0 %v217
    %v306 = vpop.f32.mrf.mxu0
    %v307 = vadd.f32 %v248, %v306
    %308 = vmatmul.f32.gmra.mxu0 %v218
    %v309 = vpop.f32.mrf.mxu0
    %v310 = vadd.f32 %v248, %v309
    %311 = vmatmul.f32.gmra.mxu0 %v219
    %v312 = vpop.f32.mrf.mxu0
    %v313 = vadd.f32 %v248, %v312
    %314 = vmatmul.f32.gmra.mxu0 %v220
    %v315 = vpop.f32.mrf.mxu0
    %v316 = vadd.f32 %v248, %v315
    %317 = vmatmul.f32.gmra.mxu0 %v221
    %v318 = vpop.f32.mrf.mxu0
    %v319 = vadd.f32 %v248, %v318
    %320 = vmatmul.f32.gmra.mxu0 %v222
    %v321 = vpop.f32.mrf.mxu0
    %v322 = vadd.f32 %v248, %v321
    %323 = vmatmul.f32.gmra.mxu0 %v223
    %v324 = vpop.f32.mrf.mxu0
    %v325 = vadd.f32 %v248, %v324
    %326 = vmatmul.f32.gmra.mxu0 %v224
    %v327 = vpop.f32.mrf.mxu0
    %v328 = vadd.f32 %v248, %v327
    %329 = vmatmul.f32.gmra.mxu0 %v225
    %v330 = vpop.f32.mrf.mxu0
    %v331 = vadd.f32 %v248, %v330
    %332 = vmatmul.f32.gmra.mxu0 %v226
    %v333 = vpop.f32.mrf.mxu0
    %v334 = vadd.f32 %v248, %v333
    %335 = vmatmul.f32.gmra.mxu0 %v227
    %v336 = vpop.f32.mrf.mxu0
    %v337 = vadd.f32 %v248, %v336
    %338 = vmatmul.f32.gmra.mxu0 %v228
    %v339 = vpop.f32.mrf.mxu0
    %v340 = vadd.f32 %v248, %v339
    %341 = vmatmul.f32.gmra.mxu0 %v229
    %v342 = vpop.f32.mrf.mxu0
    %v343 = vadd.f32 %v248, %v342
    %344 = vdwg.mxu0
    %v345 = vmax.f32 %v268, 0.0
    %v346 = vmax.f32 %v271, 0.0
    %v347 = vmax.f32 %v274, 0.0
    %v348 = vmax.f32 %v277, 0.0
    %v349 = vmax.f32 %v280, 0.0
    %v350 = vmax.f32 %v283, 0.0
    %v351 = vmax.f32 %v286, 0.0
    %v352 = vmax.f32 %v289, 0.0
    %v353 = vmax.f32 %v292, 0.0
    %v354 = vmax.f32 %v295, 0.0
    %v355 = vmax.f32 %v298, 0.0
    %v356 = vmax.f32 %v301, 0.0
    %v357 = vmax.f32 %v304, 0.0
    %v358 = vmax.f32 %v307, 0.0
    %v359 = vmax.f32 %v310, 0.0
    %v360 = vmax.f32 %v313, 0.0
    %v361 = vmax.f32 %v316, 0.0
    %v362 = vmax.f32 %v319, 0.0
    %v363 = vmax.f32 %v322, 0.0
    %v364 = vmax.f32 %v325, 0.0
    %v365 = vmax.f32 %v328, 0.0
    %v366 = vmax.f32 %v331, 0.0
    %v367 = vmax.f32 %v334, 0.0
    %v368 = vmax.f32 %v337, 0.0
    %v369 = vmax.f32 %v340, 0.0
    %v370 = vmax.f32 %v343, 0.0
    %s371 = scalar_lea.vmem [#allocation5], 128
    %v372 = vld [vmem:[%s371] sm:$0xff]
    %v373 = vld [vmem:[%s371 + $0x8] sm:$0xff]
    %v374 = vld [vmem:[%s371 + $0x10] sm:$0xff]
    %v375 = vld [vmem:[%s371 + $0x18] sm:$0xff]
    %v376 = vld [vmem:[%s371 + $0x20] sm:$0xff]
    %v377 = vld [vmem:[%s371 + $0x28] sm:$0xff]
    %v378 = vld [vmem:[%s371 + $0x30] sm:$0xff]
    %v379 = vld [vmem:[%s371 + $0x38] sm:$0xff]
    %v380 = vld [vmem:[%s371 + $0x40] sm:$0xff]
    %v381 = vld [vmem:[%s371 + $0x48] sm:$0xff]
    %v382 = vld [vmem:[%s371 + $0x50] sm:$0xff]
    %v383 = vld [vmem:[%s371 + $0x58] sm:$0xff]
    %v384 = vld [vmem:[%s371 + $0x60] sm:$0xff]
    %v385 = vld [vmem:[%s371 + $0x68] sm:$0xff]
    %v386 = vld [vmem:[%s371 + $0x70] sm:$0xff]
    %v387 = vld [vmem:[%s371 + $0x78] sm:$0xff]
    %s388 = scalar_lea.vmem [#allocation7], 1
    %v389 = vld [vmem:[%s388] sm:$0x1]
    %v391 = vperm.slane %v389, 0
    %393 = vmatpush.msra.mxu0 %v387
    %394 = vmatpush.msra.mxu0 %v386
    %395 = vmatpush.msra.mxu0 %v385
    %396 = vmatpush.msra.mxu0 %v384
    %397 = vmatpush.msra.mxu0 %v383
    %398 = vmatpush.msra.mxu0 %v382
    %399 = vmatpush.msra.mxu0 %v381
    %400 = vmatpush.msra.mxu0 %v380
    %401 = vmatpush.msra.mxu0 %v379
    %402 = vmatpush.msra.mxu0 %v378
    %403 = vmatpush.msra.mxu0 %v377
    %404 = vmatpush.msra.mxu0 %v376
    %405 = vmatpush.msra.mxu0 %v375
    %406 = vmatpush.msra.mxu0 %v374
    %407 = vmatpush.msra.mxu0 %v373
    %408 = vmatpush.msra.mxu0 %v372
    %409 = vmatmul.f32.gmra.mxu0 %v345
    %v410 = vpop.f32.mrf.mxu0
    %v411 = vadd.f32 %v391, %v410
    %412 = vmatmul.f32.gmra.mxu0 %v346
    %v413 = vpop.f32.mrf.mxu0
    %v414 = vadd.f32 %v391, %v413
    %415 = vmatmul.f32.gmra.mxu0 %v347
    %v416 = vpop.f32.mrf.mxu0
    %v417 = vadd.f32 %v391, %v416
    %418 = vmatmul.f32.gmra.mxu0 %v348
    %v419 = vpop.f32.mrf.mxu0
    %v420 = vadd.f32 %v391, %v419
    %421 = vmatmul.f32.gmra.mxu0 %v349
    %v422 = vpop.f32.mrf.mxu0
    %v423 = vadd.f32 %v391, %v422
    %424 = vmatmul.f32.gmra.mxu0 %v350
    %v425 = vpop.f32.mrf.mxu0
    %v426 = vadd.f32 %v391, %v425
    %427 = vmatmul.f32.gmra.mxu0 %v351
    %v428 = vpop.f32.mrf.mxu0
    %v429 = vadd.f32 %v391, %v428
    %430 = vmatmul.f32.gmra.mxu0 %v352
    %v431 = vpop.f32.mrf.mxu0
    %v432 = vadd.f32 %v391, %v431
    %433 = vmatmul.f32.gmra.mxu0 %v353
    %v434 = vpop.f32.mrf.mxu0
    %v435 = vadd.f32 %v391, %v434
    %436 = vmatmul.f32.gmra.mxu0 %v354
    %v437 = vpop.f32.mrf.mxu0
    %v438 = vadd.f32 %v391, %v437
    %439 = vmatmul.f32.gmra.mxu0 %v355
    %v440 = vpop.f32.mrf.mxu0
    %v441 = vadd.f32 %v391, %v440
    %442 = vmatmul.f32.gmra.mxu0 %v356
    %v443 = vpop.f32.mrf.mxu0
    %v444 = vadd.f32 %v391, %v443
    %445 = vmatmul.f32.gmra.mxu0 %v357
    %v446 = vpop.f32.mrf.mxu0
    %v447 = vadd.f32 %v391, %v446
    %448 = vmatmul.f32.gmra.mxu0 %v358
    %v449 = vpop.f32.mrf.mxu0
    %v450 = vadd.f32 %v391, %v449
    %451 = vmatmul.f32.gmra.mxu0 %v359
    %v452 = vpop.f32.mrf.mxu0
    %v453 = vadd.f32 %v391, %v452
    %454 = vmatmul.f32.gmra.mxu0 %v360
    %v455 = vpop.f32.mrf.mxu0
    %v456 = vadd.f32 %v391, %v455
    %457 = vmatmul.f32.gmra.mxu0 %v361
    %v458 = vpop.f32.mrf.mxu0
    %v459 = vadd.f32 %v391, %v458
    %460 = vmatmul.f32.gmra.mxu0 %v362
    %v461 = vpop.f32.mrf.mxu0
    %v462 = vadd.f32 %v391, %v461
    %463 = vmatmul.f32.gmra.mxu0 %v363
    %v464 = vpop.f32.mrf.mxu0
    %v465 = vadd.f32 %v391, %v464
    %466 = vmatmul.f32.gmra.mxu0 %v364
    %v467 = vpop.f32.mrf.mxu0
    %v468 = vadd.f32 %v391, %v467
    %469 = vmatmul.f32.gmra.mxu0 %v365
    %v470 = vpop.f32.mrf.mxu0
    %v471 = vadd.f32 %v391, %v470
    %472 = vmatmul.f32.gmra.mxu0 %v366
    %v473 = vpop.f32.mrf.mxu0
    %v474 = vadd.f32 %v391, %v473
    %475 = vmatmul.f32.gmra.mxu0 %v367
    %v476 = vpop.f32.mrf.mxu0
    %v477 = vadd.f32 %v391, %v476
    %478 = vmatmul.f32.gmra.mxu0 %v368
    %v479 = vpop.f32.mrf.mxu0
    %v480 = vadd.f32 %v391, %v479
    %481 = vmatmul.f32.gmra.mxu0 %v369
    %v482 = vpop.f32.mrf.mxu0
    %v483 = vadd.f32 %v391, %v482
    %484 = vmatmul.f32.gmra.mxu0 %v370
    %v485 = vpop.f32.mrf.mxu0
    %v486 = vadd.f32 %v391, %v485
    %487 = vdwg.mxu0
    %s488 = scalar_lea.vmem [#allocation5], 256
    %v489 = vld [vmem:[%s488] sm:$0xff]
    %v490 = vld [vmem:[%s488 + $0x8] sm:$0xff]
    %v491 = vld [vmem:[%s488 + $0x10] sm:$0xff]
    %v492 = vld [vmem:[%s488 + $0x18] sm:$0xff]
    %v493 = vld [vmem:[%s488 + $0x20] sm:$0xff]
    %v494 = vld [vmem:[%s488 + $0x28] sm:$0xff]
    %v495 = vld [vmem:[%s488 + $0x30] sm:$0xff]
    %v496 = vld [vmem:[%s488 + $0x38] sm:$0xff]
    %v497 = vld [vmem:[%s488 + $0x40] sm:$0xff]
    %v498 = vld [vmem:[%s488 + $0x48] sm:$0xff]
    %v499 = vld [vmem:[%s488 + $0x50] sm:$0xff]
    %v500 = vld [vmem:[%s488 + $0x58] sm:$0xff]
    %v501 = vld [vmem:[%s488 + $0x60] sm:$0xff]
    %v502 = vld [vmem:[%s488 + $0x68] sm:$0xff]
    %v503 = vld [vmem:[%s488 + $0x70] sm:$0xff]
    %v504 = vld [vmem:[%s488 + $0x78] sm:$0xff]
    %s505 = scalar_lea.vmem [#allocation7], 2
    %v506 = vld [vmem:[%s505] sm:$0x1]
    %v508 = vperm.slane %v506, 0
    %510 = vmatpush.msra.mxu0 %v504
    %511 = vmatpush.msra.mxu0 %v503
    %512 = vmatpush.msra.mxu0 %v502
    %513 = vmatpush.msra.mxu0 %v501
    %514 = vmatpush.msra.mxu0 %v500
    %515 = vmatpush.msra.mxu0 %v499
    %516 = vmatpush.msra.mxu0 %v498
    %517 = vmatpush.msra.mxu0 %v497
    %518 = vmatpush.msra.mxu0 %v496
    %519 = vmatpush.msra.mxu0 %v495
    %520 = vmatpush.msra.mxu0 %v494
    %521 = vmatpush.msra.mxu0 %v493
    %522 = vmatpush.msra.mxu0 %v492
    %523 = vmatpush.msra.mxu0 %v491
    %524 = vmatpush.msra.mxu0 %v490
    %525 = vmatpush.msra.mxu0 %v489
    %526 = vmatmul.f32.gmra.mxu0 %v411
    %v527 = vpop.f32.mrf.mxu0
    %v528 = vadd.f32 %v508, %v527
    %529 = vmatmul.f32.gmra.mxu0 %v414
    %v530 = vpop.f32.mrf.mxu0
    %v531 = vadd.f32 %v508, %v530
    %532 = vmatmul.f32.gmra.mxu0 %v417
    %v533 = vpop.f32.mrf.mxu0
    %v534 = vadd.f32 %v508, %v533
    %535 = vmatmul.f32.gmra.mxu0 %v420
    %v536 = vpop.f32.mrf.mxu0
    %v537 = vadd.f32 %v508, %v536
    %538 = vmatmul.f32.gmra.mxu0 %v423
    %v539 = vpop.f32.mrf.mxu0
    %v540 = vadd.f32 %v508, %v539
    %541 = vmatmul.f32.gmra.mxu0 %v426
    %v542 = vpop.f32.mrf.mxu0
    %v543 = vadd.f32 %v508, %v542
    %544 = vmatmul.f32.gmra.mxu0 %v429
    %v545 = vpop.f32.mrf.mxu0
    %v546 = vadd.f32 %v508, %v545
    %547 = vmatmul.f32.gmra.mxu0 %v432
    %v548 = vpop.f32.mrf.mxu0
    %v549 = vadd.f32 %v508, %v548
    %550 = vmatmul.f32.gmra.mxu0 %v435
    %v551 = vpop.f32.mrf.mxu0
    %v552 = vadd.f32 %v508, %v551
    %553 = vmatmul.f32.gmra.mxu0 %v438
    %v554 = vpop.f32.mrf.mxu0
    %v555 = vadd.f32 %v508, %v554
    %556 = vmatmul.f32.gmra.mxu0 %v441
    %v557 = vpop.f32.mrf.mxu0
    %v558 = vadd.f32 %v508, %v557
    %559 = vmatmul.f32.gmra.mxu0 %v444
    %v560 = vpop.f32.mrf.mxu0
    %v561 = vadd.f32 %v508, %v560
    %562 = vmatmul.f32.gmra.mxu0 %v447
    %v563 = vpop.f32.mrf.mxu0
    %v564 = vadd.f32 %v508, %v563
    %565 = vmatmul.f32.gmra.mxu0 %v450
    %v566 = vpop.f32.mrf.mxu0
    %v567 = vadd.f32 %v508, %v566
    %568 = vmatmul.f32.gmra.mxu0 %v453
    %v569 = vpop.f32.mrf.mxu0
    %v570 = vadd.f32 %v508, %v569
    %571 = vmatmul.f32.gmra.mxu0 %v456
    %v572 = vpop.f32.mrf.mxu0
    %v573 = vadd.f32 %v508, %v572
    %574 = vmatmul.f32.gmra.mxu0 %v459
    %v575 = vpop.f32.mrf.mxu0
    %v576 = vadd.f32 %v508, %v575
    %577 = vmatmul.f32.gmra.mxu0 %v462
    %v578 = vpop.f32.mrf.mxu0
    %v579 = vadd.f32 %v508, %v578
    %580 = vmatmul.f32.gmra.mxu0 %v465
    %v581 = vpop.f32.mrf.mxu0
    %v582 = vadd.f32 %v508, %v581
    %583 = vmatmul.f32.gmra.mxu0 %v468
    %v584 = vpop.f32.mrf.mxu0
    %v585 = vadd.f32 %v508, %v584
    %586 = vmatmul.f32.gmra.mxu0 %v471
    %v587 = vpop.f32.mrf.mxu0
    %v588 = vadd.f32 %v508, %v587
    %589 = vmatmul.f32.gmra.mxu0 %v474
    %v590 = vpop.f32.mrf.mxu0
    %v591 = vadd.f32 %v508, %v590
    %592 = vmatmul.f32.gmra.mxu0 %v477
    %v593 = vpop.f32.mrf.mxu0
    %v594 = vadd.f32 %v508, %v593
    %595 = vmatmul.f32.gmra.mxu0 %v480
    %v596 = vpop.f32.mrf.mxu0
    %v597 = vadd.f32 %v508, %v596
    %598 = vmatmul.f32.gmra.mxu0 %v483
    %v599 = vpop.f32.mrf.mxu0
    %v600 = vadd.f32 %v508, %v599
    %601 = vmatmul.f32.gmra.mxu0 %v486
    %v602 = vpop.f32.mrf.mxu0
    %v603 = vadd.f32 %v508, %v602
    %604 = vdwg.mxu0
    %v605 = vmul.f32 %v528, %v178
    %v606 = vmul.f32 %v531, %v179
    %v607 = vmul.f32 %v534, %v180
    %v608 = vmul.f32 %v537, %v181
    %v609 = vmul.f32 %v540, %v182
    %v610 = vmul.f32 %v543, %v183
    %v611 = vmul.f32 %v546, %v184
    %v612 = vmul.f32 %v549, %v185
    %v613 = vmul.f32 %v552, %v186
    %v614 = vmul.f32 %v555, %v187
    %v615 = vmul.f32 %v558, %v188
    %v616 = vmul.f32 %v561, %v189
    %v617 = vmul.f32 %v564, %v190
    %v618 = vmul.f32 %v567, %v191
    %v619 = vmul.f32 %v570, %v192
    %v620 = vmul.f32 %v573, %v193
    %v621 = vmul.f32 %v576, %v194
    %v622 = vmul.f32 %v579, %v195
    %v623 = vmul.f32 %v582, %v196
    %v624 = vmul.f32 %v585, %v197
    %v625 = vmul.f32 %v588, %v198
    %v626 = vmul.f32 %v591, %v199
    %v627 = vmul.f32 %v594, %v200
    %v628 = vmul.f32 %v597, %v201
    %v629 = vmul.f32 %v600, %v202
    %v630 = vmul.f32 %v603, %v203
    %v631 = vadd.f32 %v605, %v606
    %v632 = vadd.f32 %v631, %v607
    %v633 = vadd.f32 %v632, %v608
    %v634 = vadd.f32 %v633, %v609
    %v635 = vadd.f32 %v634, %v610
    %v636 = vadd.f32 %v635, %v611
    %v637 = vadd.f32 %v636, %v612
    %v638 = vadd.f32 %v637, %v613
    %v639 = vadd.f32 %v638, %v614
    %v640 = vadd.f32 %v639, %v615
    %v641 = vadd.f32 %v640, %v616
    %v642 = vadd.f32 %v641, %v617
    %v643 = vadd.f32 %v642, %v618
    %v644 = vadd.f32 %v643, %v619
    %v645 = vadd.f32 %v644, %v620
    %v646 = vadd.f32 %v645, %v621
    %v647 = vadd.f32 %v646, %v622
    %v648 = vadd.f32 %v647, %v623
    %v649 = vadd.f32 %v648, %v624
    %v650 = vadd.f32 %v649, %v625
    %v651 = vadd.f32 %v650, %v626
    %v652 = vadd.f32 %v651, %v627
    %v653 = vadd.f32 %v652, %v628
    %v654 = vadd.f32 %v653, %v629
    %v655 = vadd.f32 %v654, %v630
    %v656 = vrot.slane %v655, 4
    %v657 = vadd.f32 %v655, %v656
    %v658 = vrot.slane %v657, 2
    %v659 = vadd.f32 %v657, %v658
    %v660 = vrot.slane %v659, 1
    %v661 = vadd.f32 %v659, %v660
    %v662 = vmul.f32 %v661, 0.0049261083
    %v663 = vsub.f32 %v528, %v662
    %v664 = vsub.f32 %v531, %v662
    %v665 = vsub.f32 %v534, %v662
    %v666 = vsub.f32 %v537, %v662
    %v667 = vsub.f32 %v540, %v662
    %v668 = vsub.f32 %v543, %v662
    %v669 = vsub.f32 %v546, %v662
    %v670 = vsub.f32 %v549, %v662
    %v671 = vsub.f32 %v552, %v662
    %v672 = vsub.f32 %v555, %v662
    %v673 = vsub.f32 %v558, %v662
    %v674 = vsub.f32 %v561, %v662
    %v675 = vsub.f32 %v564, %v662
    %v676 = vsub.f32 %v567, %v662
    %v677 = vsub.f32 %v570, %v662
    %v678 = vsub.f32 %v573, %v662
    %v679 = vsub.f32 %v576, %v662
    %v680 = vsub.f32 %v579, %v662
    %v681 = vsub.f32 %v582, %v662
    %v682 = vsub.f32 %v585, %v662
    %v683 = vsub.f32 %v588, %v662
    %v684 = vsub.f32 %v591, %v662
    %v685 = vsub.f32 %v594, %v662
    %v686 = vsub.f32 %v597, %v662
    %v687 = vsub.f32 %v600, %v662
    %v688 = vsub.f32 %v603, %v662
    %v689 = vmul.f32 %v663, %v663
    %v690 = vmul.f32 %v664, %v664
    %v691 = vmul.f32 %v665, %v665
    %v692 = vmul.f32 %v666, %v666
    %v693 = vmul.f32 %v667, %v667
    %v694 = vmul.f32 %v668, %v668
    %v695 = vmul.f32 %v669, %v669
    %v696 = vmul.f32 %v670, %v670
    %v697 = vmul.f32 %v671, %v671
    %v698 = vmul.f32 %v672, %v672
    %v699 = vmul.f32 %v673, %v673
    %v700 = vmul.f32 %v674, %v674
    %v701 = vmul.f32 %v675, %v675
    %v702 = vmul.f32 %v676, %v676
    %v703 = vmul.f32 %v677, %v677
    %v704 = vmul.f32 %v678, %v678
    %v705 = vmul.f32 %v679, %v679
    %v706 = vmul.f32 %v680, %v680
    %v707 = vmul.f32 %v681, %v681
    %v708 = vmul.f32 %v682, %v682
    %v709 = vmul.f32 %v683, %v683
    %v710 = vmul.f32 %v684, %v684
    %v711 = vmul.f32 %v685, %v685
    %v712 = vmul.f32 %v686, %v686
    %v713 = vmul.f32 %v687, %v687
    %v714 = vmul.f32 %v688, %v688
    %v715 = vmul.f32 %v689, %v178
    %v716 = vmul.f32 %v690, %v179
    %v717 = vmul.f32 %v691, %v180
    %v718 = vmul.f32 %v692, %v181
    %v719 = vmul.f32 %v693, %v182
    %v720 = vmul.f32 %v694, %v183
    %v721 = vmul.f32 %v695, %v184
    %v722 = vmul.f32 %v696, %v185
    %v723 = vmul.f32 %v697, %v186
    %v724 = vmul.f32 %v698, %v187
    %v725 = vmul.f32 %v699, %v188
    %v726 = vmul.f32 %v700, %v189
    %v727 = vmul.f32 %v701, %v190
    %v728 = vmul.f32 %v702, %v191
    %v729 = vmul.f32 %v703, %v192
    %v730 = vmul.f32 %v704, %v193
    %v731 = vmul.f32 %v705, %v194
    %v732 = vmul.f32 %v706, %v195
    %v733 = vmul.f32 %v707, %v196
    %v734 = vmul.f32 %v708, %v197
    %v735 = vmul.f32 %v709, %v198
    %v736 = vmul.f32 %v710, %v199
    %v737 = vmul.f32 %v711, %v200
    %v738 = vmul.f32 %v712, %v201
    %v739 = vmul.f32 %v713, %v202
    %v740 = vmul.f32 %v714, %v203
    %v741 = vadd.f32 %v715, %v716
    %v742 = vadd.f32 %v741, %v717
    %v743 = vadd.f32 %v742, %v718
    %v744 = vadd.f32 %v743, %v719
    %v745 = vadd.f32 %v744, %v720
    %v746 = vadd.f32 %v745, %v721
    %v747 = vadd.f32 %v746, %v722
    %v748 = vadd.f32 %v747, %v723
    %v749 = vadd.f32 %v748, %v724
    %v750 = vadd.f32 %v749, %v725
    %v751 = vadd.f32 %v750, %v726
    %v752 = vadd.f32 %v751, %v727
    %v753 = vadd.f32 %v752, %v728
    %v754 = vadd.f32 %v753, %v729
    %v755 = vadd.f32 %v754, %v730
    %v756 = vadd.f32 %v755, %v731
    %v757 = vadd.f32 %v756, %v732
    %v758 = vadd.f32 %v757, %v733
    %v759 = vadd.f32 %v758, %v734
    %v760 = vadd.f32 %v759, %v735
    %v761 = vadd.f32 %v760, %v736
    %v762 = vadd.f32 %v761, %v737
    %v763 = vadd.f32 %v762, %v738
    %v764 = vadd.f32 %v763, %v739
    %v765 = vadd.f32 %v764, %v740
    %v766 = vrot.slane %v765, 4
    %v767 = vadd.f32 %v765, %v766
    %v768 = vrot.slane %v767, 2
    %v769 = vadd.f32 %v767, %v768
    %v770 = vrot.slane %v769, 1
    %v771 = vadd.f32 %v769, %v770
    %v772 = vmul.f32 %v771, 0.0049261083
    %v773 = vadd.f32 %v772, 1e-05
    %v774 = vrsqrt.pop %v773
    %v775 = vmul.f32 %v774, %v773
    %v776 = vmul.f32 %v775, %v774
    %v777 = vmul.f32 0.5, %v776
    %v778 = vsub.f32 1.5, %v777
    %v779 = vmul.f32 %v774, %v778
    %vm780 = vweird.f32 %v773
    %vm781 = vweird.f32 %v774
    %vm782 = vmor %vm780, %vm781
    %v783 = vsel %vm782, %v774, %v779
    %v784 = vmul.f32 %v663, %v783
    %v785 = vmul.f32 %v664, %v783
    %v786 = vmul.f32 %v665, %v783
    %v787 = vmul.f32 %v666, %v783
    %v788 = vmul.f32 %v667, %v783
    %v789 = vmul.f32 %v668, %v783
    %v790 = vmul.f32 %v669, %v783
    %v791 = vmul.f32 %v670, %v783
    %v792 = vmul.f32 %v671, %v783
    %v793 = vmul.f32 %v672, %v783
    %v794 = vmul.f32 %v673, %v783
    %v795 = vmul.f32 %v674, %v783
    %v796 = vmul.f32 %v675, %v783
    %v797 = vmul.f32 %v676, %v783
    %v798 = vmul.f32 %v677, %v783
    %v799 = vmul.f32 %v678, %v783
    %v800 = vmul.f32 %v679, %v783
    %v801 = vmul.f32 %v680, %v783
    %v802 = vmul.f32 %v681, %v783
    %v803 = vmul.f32 %v682, %v783
    %v804 = vmul.f32 %v683, %v783
    %v805 = vmul.f32 %v684, %v783
    %v806 = vmul.f32 %v685, %v783
    %v807 = vmul.f32 %v686, %v783
    %v808 = vmul.f32 %v687, %v783
    %v809 = vmul.f32 %v688, %v783
    %s810 = scalar_lea.vmem [#allocation8], 2
    %v811 = vld [vmem:[%s810] sm:$0x1]
    %v813 = vperm.slane %v811, 0
    %v815 = vmul.f32 %v784, %v813
    %v816 = vmul.f32 %v785, %v813
    %v817 = vmul.f32 %v786, %v813
    %v818 = vmul.f32 %v787, %v813
    %v819 = vmul.f32 %v788, %v813
    %v820 = vmul.f32 %v789, %v813
    %v821 = vmul.f32 %v790, %v813
    %v822 = vmul.f32 %v791, %v813
    %v823 = vmul.f32 %v792, %v813
    %v824 = vmul.f32 %v793, %v813
    %v825 = vmul.f32 %v794, %v813
    %v826 = vmul.f32 %v795, %v813
    %v827 = vmul.f32 %v796, %v813
    %v828 = vmul.f32 %v797, %v813
    %v829 = vmul.f32 %v798, %v813
    %v830 = vmul.f32 %v799, %v813
    %v831 = vmul.f32 %v800, %v813
    %v832 = vmul.f32 %v801, %v813
    %v833 = vmul.f32 %v802, %v813
    %v834 = vmul.f32 %v803, %v813
    %v835 = vmul.f32 %v804, %v813
    %v836 = vmul.f32 %v805, %v813
    %v837 = vmul.f32 %v806, %v813
    %v838 = vmul.f32 %v807, %v813
    %v839 = vmul.f32 %v808, %v813
    %v840 = vmul.f32 %v809, %v813
    %s841 = scalar_lea.vmem [#allocation10], 2
    %v842 = vld [vmem:[%s841] sm:$0x1]
    %v844 = vperm.slane %v842, 0
    %v846 = vadd.f32 %v815, %v844
    %v847 = vadd.f32 %v816, %v844
    %v848 = vadd.f32 %v817, %v844
    %v849 = vadd.f32 %v818, %v844
    %v850 = vadd.f32 %v819, %v844
    %v851 = vadd.f32 %v820, %v844
    %v852 = vadd.f32 %v821, %v844
    %v853 = vadd.f32 %v822, %v844
    %v854 = vadd.f32 %v823, %v844
    %v855 = vadd.f32 %v824, %v844
    %v856 = vadd.f32 %v825, %v844
    %v857 = vadd.f32 %v826, %v844
    %v858 = vadd.f32 %v827, %v844
    %v859 = vadd.f32 %v828, %v844
    %v860 = vadd.f32 %v829, %v844
    %v861 = vadd.f32 %v830, %v844
    %v862 = vadd.f32 %v831, %v844
    %v863 = vadd.f32 %v832, %v844
    %v864 = vadd.f32 %v833, %v844
    %v865 = vadd.f32 %v834, %v844
    %v866 = vadd.f32 %v835, %v844
    %v867 = vadd.f32 %v836, %v844
    %v868 = vadd.f32 %v837, %v844
    %v869 = vadd.f32 %v838, %v844
    %v870 = vadd.f32 %v839, %v844
    %v871 = vadd.f32 %v840, %v844
    %v872 = vmax.f32 %v846, 0.0
    %v873 = vmax.f32 %v847, 0.0
    %v874 = vmax.f32 %v848, 0.0
    %v875 = vmax.f32 %v849, 0.0
    %v876 = vmax.f32 %v850, 0.0
    %v877 = vmax.f32 %v851, 0.0
    %v878 = vmax.f32 %v852, 0.0
    %v879 = vmax.f32 %v853, 0.0
    %v880 = vmax.f32 %v854, 0.0
    %v881 = vmax.f32 %v855, 0.0
    %v882 = vmax.f32 %v856, 0.0
    %v883 = vmax.f32 %v857, 0.0
    %v884 = vmax.f32 %v858, 0.0
    %v885 = vmax.f32 %v859, 0.0
    %v886 = vmax.f32 %v860, 0.0
    %v887 = vmax.f32 %v861, 0.0
    %v888 = vmax.f32 %v862, 0.0
    %v889 = vmax.f32 %v863, 0.0
    %v890 = vmax.f32 %v864, 0.0
    %v891 = vmax.f32 %v865, 0.0
    %v892 = vmax.f32 %v866, 0.0
    %v893 = vmax.f32 %v867, 0.0
    %v894 = vmax.f32 %v868, 0.0
    %v895 = vmax.f32 %v869, 0.0
    %v896 = vmax.f32 %v870, 0.0
    %v897 = vmax.f32 %v871, 0.0
    %s898 = scalar_lea.vmem [#allocation5], 384
    %v899 = vld [vmem:[%s898] sm:$0xff]
    %v900 = vld [vmem:[%s898 + $0x8] sm:$0xff]
    %v901 = vld [vmem:[%s898 + $0x10] sm:$0xff]
    %v902 = vld [vmem:[%s898 + $0x18] sm:$0xff]
    %v903 = vld [vmem:[%s898 + $0x20] sm:$0xff]
    %v904 = vld [vmem:[%s898 + $0x28] sm:$0xff]
    %v905 = vld [vmem:[%s898 + $0x30] sm:$0xff]
    %v906 = vld [vmem:[%s898 + $0x38] sm:$0xff]
    %v907 = vld [vmem:[%s898 + $0x40] sm:$0xff]
    %v908 = vld [vmem:[%s898 + $0x48] sm:$0xff]
    %v909 = vld [vmem:[%s898 + $0x50] sm:$0xff]
    %v910 = vld [vmem:[%s898 + $0x58] sm:$0xff]
    %v911 = vld [vmem:[%s898 + $0x60] sm:$0xff]
    %v912 = vld [vmem:[%s898 + $0x68] sm:$0xff]
    %v913 = vld [vmem:[%s898 + $0x70] sm:$0xff]
    %v914 = vld [vmem:[%s898 + $0x78] sm:$0xff]
    %s915 = scalar_lea.vmem [#allocation7], 3
    %v916 = vld [vmem:[%s915] sm:$0x1]
    %v918 = vperm.slane %v916, 0
    %920 = vmatpush.msra.mxu0 %v914
    %921 = vmatpush.msra.mxu0 %v913
    %922 = vmatpush.msra.mxu0 %v912
    %923 = vmatpush.msra.mxu0 %v911
    %924 = vmatpush.msra.mxu0 %v910
    %925 = vmatpush.msra.mxu0 %v909
    %926 = vmatpush.msra.mxu0 %v908
    %927 = vmatpush.msra.mxu0 %v907
    %928 = vmatpush.msra.mxu0 %v906
    %929 = vmatpush.msra.mxu0 %v905
    %930 = vmatpush.msra.mxu0 %v904
    %931 = vmatpush.msra.mxu0 %v903
    %932 = vmatpush.msra.mxu0 %v902
    %933 = vmatpush.msra.mxu0 %v901
    %934 = vmatpush.msra.mxu0 %v900
    %935 = vmatpush.msra.mxu0 %v899
    %936 = vmatmul.f32.gmra.mxu0 %v872
    %v937 = vpop.f32.mrf.mxu0
    %v938 = vadd.f32 %v918, %v937
    %939 = vmatmul.f32.gmra.mxu0 %v873
    %v940 = vpop.f32.mrf.mxu0
    %v941 = vadd.f32 %v918, %v940
    %942 = vmatmul.f32.gmra.mxu0 %v874
    %v943 = vpop.f32.mrf.mxu0
    %v944 = vadd.f32 %v918, %v943
    %945 = vmatmul.f32.gmra.mxu0 %v875
    %v946 = vpop.f32.mrf.mxu0
    %v947 = vadd.f32 %v918, %v946
    %948 = vmatmul.f32.gmra.mxu0 %v876
    %v949 = vpop.f32.mrf.mxu0
    %v950 = vadd.f32 %v918, %v949
    %951 = vmatmul.f32.gmra.mxu0 %v877
    %v952 = vpop.f32.mrf.mxu0
    %v953 = vadd.f32 %v918, %v952
    %954 = vmatmul.f32.gmra.mxu0 %v878
    %v955 = vpop.f32.mrf.mxu0
    %v956 = vadd.f32 %v918, %v955
    %957 = vmatmul.f32.gmra.mxu0 %v879
    %v958 = vpop.f32.mrf.mxu0
    %v959 = vadd.f32 %v918, %v958
    %960 = vmatmul.f32.gmra.mxu0 %v880
    %v961 = vpop.f32.mrf.mxu0
    %v962 = vadd.f32 %v918, %v961
    %963 = vmatmul.f32.gmra.mxu0 %v881
    %v964 = vpop.f32.mrf.mxu0
    %v965 = vadd.f32 %v918, %v964
    %966 = vmatmul.f32.gmra.mxu0 %v882
    %v967 = vpop.f32.mrf.mxu0
    %v968 = vadd.f32 %v918, %v967
    %969 = vmatmul.f32.gmra.mxu0 %v883
    %v970 = vpop.f32.mrf.mxu0
    %v971 = vadd.f32 %v918, %v970
    %972 = vmatmul.f32.gmra.mxu0 %v884
    %v973 = vpop.f32.mrf.mxu0
    %v974 = vadd.f32 %v918, %v973
    %975 = vmatmul.f32.gmra.mxu0 %v885
    %v976 = vpop.f32.mrf.mxu0
    %v977 = vadd.f32 %v918, %v976
    %978 = vmatmul.f32.gmra.mxu0 %v886
    %v979 = vpop.f32.mrf.mxu0
    %v980 = vadd.f32 %v918, %v979
    %981 = vmatmul.f32.gmra.mxu0 %v887
    %v982 = vpop.f32.mrf.mxu0
    %v983 = vadd.f32 %v918, %v982
    %984 = vmatmul.f32.gmra.mxu0 %v888
    %v985 = vpop.f32.mrf.mxu0
    %v986 = vadd.f32 %v918, %v985
    %987 = vmatmul.f32.gmra.mxu0 %v889
    %v988 = vpop.f32.mrf.mxu0
    %v989 = vadd.f32 %v918, %v988
    %990 = vmatmul.f32.gmra.mxu0 %v890
    %v991 = vpop.f32.mrf.mxu0
    %v992 = vadd.f32 %v918, %v991
    %993 = vmatmul.f32.gmra.mxu0 %v891
    %v994 = vpop.f32.mrf.mxu0
    %v995 = vadd.f32 %v918, %v994
    %996 = vmatmul.f32.gmra.mxu0 %v892
    %v997 = vpop.f32.mrf.mxu0
    %v998 = vadd.f32 %v918, %v997
    %999 = vmatmul.f32.gmra.mxu0 %v893
    %v1000 = vpop.f32.mrf.mxu0
    %v1001 = vadd.f32 %v918, %v1000
    %1002 = vmatmul.f32.gmra.mxu0 %v894
    %v1003 = vpop.f32.mrf.mxu0
    %v1004 = vadd.f32 %v918, %v1003
    %1005 = vmatmul.f32.gmra.mxu0 %v895
    %v1006 = vpop.f32.mrf.mxu0
    %v1007 = vadd.f32 %v918, %v1006
    %1008 = vmatmul.f32.gmra.mxu0 %v896
    %v1009 = vpop.f32.mrf.mxu0
    %v1010 = vadd.f32 %v918, %v1009
    %1011 = vmatmul.f32.gmra.mxu0 %v897
    %v1012 = vpop.f32.mrf.mxu0
    %v1013 = vadd.f32 %v918, %v1012
    %1014 = vdwg.mxu0
    %v1015 = vmul.f32 %v938, %v178
    %v1016 = vmul.f32 %v941, %v179
    %v1017 = vmul.f32 %v944, %v180
    %v1018 = vmul.f32 %v947, %v181
    %v1019 = vmul.f32 %v950, %v182
    %v1020 = vmul.f32 %v953, %v183
    %v1021 = vmul.f32 %v956, %v184
    %v1022 = vmul.f32 %v959, %v185
    %v1023 = vmul.f32 %v962, %v186
    %v1024 = vmul.f32 %v965, %v187
    %v1025 = vmul.f32 %v968, %v188
    %v1026 = vmul.f32 %v971, %v189
    %v1027 = vmul.f32 %v974, %v190
    %v1028 = vmul.f32 %v977, %v191
    %v1029 = vmul.f32 %v980, %v192
    %v1030 = vmul.f32 %v983, %v193
    %v1031 = vmul.f32 %v986, %v194
    %v1032 = vmul.f32 %v989, %v195
    %v1033 = vmul.f32 %v992, %v196
    %v1034 = vmul.f32 %v995, %v197
    %v1035 = vmul.f32 %v998, %v198
    %v1036 = vmul.f32 %v1001, %v199
    %v1037 = vmul.f32 %v1004, %v200
    %v1038 = vmul.f32 %v1007, %v201
    %v1039 = vmul.f32 %v1010, %v202
    %v1040 = vmul.f32 %v1013, %v203
    %v1041 = vadd.f32 %v1015, %v1016
    %v1042 = vadd.f32 %v1041, %v1017
    %v1043 = vadd.f32 %v1042, %v1018
    %v1044 = vadd.f32 %v1043, %v1019
    %v1045 = vadd.f32 %v1044, %v1020
    %v1046 = vadd.f32 %v1045, %v1021
    %v1047 = vadd.f32 %v1046, %v1022
    %v1048 = vadd.f32 %v1047, %v1023
    %v1049 = vadd.f32 %v1048, %v1024
    %v1050 = vadd.f32 %v1049, %v1025
    %v1051 = vadd.f32 %v1050, %v1026
    %v1052 = vadd.f32 %v1051, %v1027
    %v1053 = vadd.f32 %v1052, %v1028
    %v1054 = vadd.f32 %v1053, %v1029
    %v1055 = vadd.f32 %v1054, %v1030
    %v1056 = vadd.f32 %v1055, %v1031
    %v1057 = vadd.f32 %v1056, %v1032
    %v1058 = vadd.f32 %v1057, %v1033
    %v1059 = vadd.f32 %v1058, %v1034
    %v1060 = vadd.f32 %v1059, %v1035
    %v1061 = vadd.f32 %v1060, %v1036
    %v1062 = vadd.f32 %v1061, %v1037
    %v1063 = vadd.f32 %v1062, %v1038
    %v1064 = vadd.f32 %v1063, %v1039
    %v1065 = vadd.f32 %v1064, %v1040
    %v1066 = vrot.slane %v1065, 4
    %v1067 = vadd.f32 %v1065, %v1066
    %v1068 = vrot.slane %v1067, 2
    %v1069 = vadd.f32 %v1067, %v1068
    %v1070 = vrot.slane %v1069, 1
    %v1071 = vadd.f32 %v1069, %v1070
    %v1072 = vmul.f32 %v1071, 0.0049261083
    %v1073 = vsub.f32 %v938, %v1072
    %v1074 = vsub.f32 %v941, %v1072
    %v1075 = vsub.f32 %v944, %v1072
    %v1076 = vsub.f32 %v947, %v1072
    %v1077 = vsub.f32 %v950, %v1072
    %v1078 = vsub.f32 %v953, %v1072
    %v1079 = vsub.f32 %v956, %v1072
    %v1080 = vsub.f32 %v959, %v1072
    %v1081 = vsub.f32 %v962, %v1072
    %v1082 = vsub.f32 %v965, %v1072
    %v1083 = vsub.f32 %v968, %v1072
    %v1084 = vsub.f32 %v971, %v1072
    %v1085 = vsub.f32 %v974, %v1072
    %v1086 = vsub.f32 %v977, %v1072
    %v1087 = vsub.f32 %v980, %v1072
    %v1088 = vsub.f32 %v983, %v1072
    %v1089 = vsub.f32 %v986, %v1072
    %v1090 = vsub.f32 %v989, %v1072
    %v1091 = vsub.f32 %v992, %v1072
    %v1092 = vsub.f32 %v995, %v1072
    %v1093 = vsub.f32 %v998, %v1072
    %v1094 = vsub.f32 %v1001, %v1072
    %v1095 = vsub.f32 %v1004, %v1072
    %v1096 = vsub.f32 %v1007, %v1072
    %v1097 = vsub.f32 %v1010, %v1072
    %v1098 = vsub.f32 %v1013, %v1072
    %v1099 = vmul.f32 %v1073, %v1073
    %v1100 = vmul.f32 %v1074, %v1074
    %v1101 = vmul.f32 %v1075, %v1075
    %v1102 = vmul.f32 %v1076, %v1076
    %v1103 = vmul.f32 %v1077, %v1077
    %v1104 = vmul.f32 %v1078, %v1078
    %v1105 = vmul.f32 %v1079, %v1079
    %v1106 = vmul.f32 %v1080, %v1080
    %v1107 = vmul.f32 %v1081, %v1081
    %v1108 = vmul.f32 %v1082, %v1082
    %v1109 = vmul.f32 %v1083, %v1083
    %v1110 = vmul.f32 %v1084, %v1084
    %v1111 = vmul.f32 %v1085, %v1085
    %v1112 = vmul.f32 %v1086, %v1086
    %v1113 = vmul.f32 %v1087, %v1087
    %v1114 = vmul.f32 %v1088, %v1088
    %v1115 = vmul.f32 %v1089, %v1089
    %v1116 = vmul.f32 %v1090, %v1090
    %v1117 = vmul.f32 %v1091, %v1091
    %v1118 = vmul.f32 %v1092, %v1092
    %v1119 = vmul.f32 %v1093, %v1093
    %v1120 = vmul.f32 %v1094, %v1094
    %v1121 = vmul.f32 %v1095, %v1095
    %v1122 = vmul.f32 %v1096, %v1096
    %v1123 = vmul.f32 %v1097, %v1097
    %v1124 = vmul.f32 %v1098, %v1098
    %v1125 = vmul.f32 %v1099, %v178
    %v1126 = vmul.f32 %v1100, %v179
    %v1127 = vmul.f32 %v1101, %v180
    %v1128 = vmul.f32 %v1102, %v181
    %v1129 = vmul.f32 %v1103, %v182
    %v1130 = vmul.f32 %v1104, %v183
    %v1131 = vmul.f32 %v1105, %v184
    %v1132 = vmul.f32 %v1106, %v185
    %v1133 = vmul.f32 %v1107, %v186
    %v1134 = vmul.f32 %v1108, %v187
    %v1135 = vmul.f32 %v1109, %v188
    %v1136 = vmul.f32 %v1110, %v189
    %v1137 = vmul.f32 %v1111, %v190
    %v1138 = vmul.f32 %v1112, %v191
    %v1139 = vmul.f32 %v1113, %v192
    %v1140 = vmul.f32 %v1114, %v193
    %v1141 = vmul.f32 %v1115, %v194
    %v1142 = vmul.f32 %v1116, %v195
    %v1143 = vmul.f32 %v1117, %v196
    %v1144 = vmul.f32 %v1118, %v197
    %v1145 = vmul.f32 %v1119, %v198
    %v1146 = vmul.f32 %v1120, %v199
    %v1147 = vmul.f32 %v1121, %v200
    %v1148 = vmul.f32 %v1122, %v201
    %v1149 = vmul.f32 %v1123, %v202
    %v1150 = vmul.f32 %v1124, %v203
    %v1151 = vadd.f32 %v1125, %v1126
    %v1152 = vadd.f32 %v1151, %v1127
    %v1153 = vadd.f32 %v1152, %v1128
    %v1154 = vadd.f32 %v1153, %v1129
    %v1155 = vadd.f32 %v1154, %v1130
    %v1156 = vadd.f32 %v1155, %v1131
    %v1157 = vadd.f32 %v1156, %v1132
    %v1158 = vadd.f32 %v1157, %v1133
    %v1159 = vadd.f32 %v1158, %v1134
    %v1160 = vadd.f32 %v1159, %v1135
    %v1161 = vadd.f32 %v1160, %v1136
    %v1162 = vadd.f32 %v1161, %v1137
    %v1163 = vadd.f32 %v1162, %v1138
    %v1164 = vadd.f32 %v1163, %v1139
    %v1165 = vadd.f32 %v1164, %v1140
    %v1166 = vadd.f32 %v1165, %v1141
    %v1167 = vadd.f32 %v1166, %v1142
    %v1168 = vadd.f32 %v1167, %v1143
    %v1169 = vadd.f32 %v1168, %v1144
    %v1170 = vadd.f32 %v1169, %v1145
    %v1171 = vadd.f32 %v1170, %v1146
    %v1172 = vadd.f32 %v1171, %v1147
    %v1173 = vadd.f32 %v1172, %v1148
    %v1174 = vadd.f32 %v1173, %v1149
    %v1175 = vadd.f32 %v1174, %v1150
    %v1176 = vrot.slane %v1175, 4
    %v1177 = vadd.f32 %v1175, %v1176
    %v1178 = vrot.slane %v1177, 2
    %v1179 = vadd.f32 %v1177, %v1178
    %v1180 = vrot.slane %v1179, 1
    %v1181 = vadd.f32 %v1179, %v1180
    %v1182 = vmul.f32 %v1181, 0.0049261083
    %v1183 = vadd.f32 %v1182, 1e-05
    %v1184 = vrsqrt.pop %v1183
    %v1185 = vmul.f32 %v1184, %v1183
    %v1186 = vmul.f32 %v1185, %v1184
    %v1187 = vmul.f32 0.5, %v1186
    %v1188 = vsub.f32 1.5, %v1187
    %v1189 = vmul.f32 %v1184, %v1188
    %vm1190 = vweird.f32 %v1183
    %vm1191 = vweird.f32 %v1184
    %vm1192 = vmor %vm1190, %vm1191
    %v1193 = vsel %vm1192, %v1184, %v1189
    %v1194 = vmul.f32 %v1073, %v1193
    %v1195 = vmul.f32 %v1074, %v1193
    %v1196 = vmul.f32 %v1075, %v1193
    %v1197 = vmul.f32 %v1076, %v1193
    %v1198 = vmul.f32 %v1077, %v1193
    %v1199 = vmul.f32 %v1078, %v1193
    %v1200 = vmul.f32 %v1079, %v1193
    %v1201 = vmul.f32 %v1080, %v1193
    %v1202 = vmul.f32 %v1081, %v1193
    %v1203 = vmul.f32 %v1082, %v1193
    %v1204 = vmul.f32 %v1083, %v1193
    %v1205 = vmul.f32 %v1084, %v1193
    %v1206 = vmul.f32 %v1085, %v1193
    %v1207 = vmul.f32 %v1086, %v1193
    %v1208 = vmul.f32 %v1087, %v1193
    %v1209 = vmul.f32 %v1088, %v1193
    %v1210 = vmul.f32 %v1089, %v1193
    %v1211 = vmul.f32 %v1090, %v1193
    %v1212 = vmul.f32 %v1091, %v1193
    %v1213 = vmul.f32 %v1092, %v1193
    %v1214 = vmul.f32 %v1093, %v1193
    %v1215 = vmul.f32 %v1094, %v1193
    %v1216 = vmul.f32 %v1095, %v1193
    %v1217 = vmul.f32 %v1096, %v1193
    %v1218 = vmul.f32 %v1097, %v1193
    %v1219 = vmul.f32 %v1098, %v1193
    %s1220 = scalar_lea.vmem [#allocation8], 3
    %v1221 = vld [vmem:[%s1220] sm:$0x1]
    %v1223 = vperm.slane %v1221, 0
    %v1225 = vmul.f32 %v1194, %v1223
    %v1226 = vmul.f32 %v1195, %v1223
    %v1227 = vmul.f32 %v1196, %v1223
    %v1228 = vmul.f32 %v1197, %v1223
    %v1229 = vmul.f32 %v1198, %v1223
    %v1230 = vmul.f32 %v1199, %v1223
    %v1231 = vmul.f32 %v1200, %v1223
    %v1232 = vmul.f32 %v1201, %v1223
    %v1233 = vmul.f32 %v1202, %v1223
    %v1234 = vmul.f32 %v1203, %v1223
    %v1235 = vmul.f32 %v1204, %v1223
    %v1236 = vmul.f32 %v1205, %v1223
    %v1237 = vmul.f32 %v1206, %v1223
    %v1238 = vmul.f32 %v1207, %v1223
    %v1239 = vmul.f32 %v1208, %v1223
    %v1240 = vmul.f32 %v1209, %v1223
    %v1241 = vmul.f32 %v1210, %v1223
    %v1242 = vmul.f32 %v1211, %v1223
    %v1243 = vmul.f32 %v1212, %v1223
    %v1244 = vmul.f32 %v1213, %v1223
    %v1245 = vmul.f32 %v1214, %v1223
    %v1246 = vmul.f32 %v1215, %v1223
    %v1247 = vmul.f32 %v1216, %v1223
    %v1248 = vmul.f32 %v1217, %v1223
    %v1249 = vmul.f32 %v1218, %v1223
    %v1250 = vmul.f32 %v1219, %v1223
    %s1251 = scalar_lea.vmem [#allocation10], 3
    %v1252 = vld [vmem:[%s1251] sm:$0x1]
    %v1254 = vperm.slane %v1252, 0
    %v1256 = vadd.f32 %v1225, %v1254
    %v1257 = vadd.f32 %v1226, %v1254
    %v1258 = vadd.f32 %v1227, %v1254
    %v1259 = vadd.f32 %v1228, %v1254
    %v1260 = vadd.f32 %v1229, %v1254
    %v1261 = vadd.f32 %v1230, %v1254
    %v1262 = vadd.f32 %v1231, %v1254
    %v1263 = vadd.f32 %v1232, %v1254
    %v1264 = vadd.f32 %v1233, %v1254
    %v1265 = vadd.f32 %v1234, %v1254
    %v1266 = vadd.f32 %v1235, %v1254
    %v1267 = vadd.f32 %v1236, %v1254
    %v1268 = vadd.f32 %v1237, %v1254
    %v1269 = vadd.f32 %v1238, %v1254
    %v1270 = vadd.f32 %v1239, %v1254
    %v1271 = vadd.f32 %v1240, %v1254
    %v1272 = vadd.f32 %v1241, %v1254
    %v1273 = vadd.f32 %v1242, %v1254
    %v1274 = vadd.f32 %v1243, %v1254
    %v1275 = vadd.f32 %v1244, %v1254
    %v1276 = vadd.f32 %v1245, %v1254
    %v1277 = vadd.f32 %v1246, %v1254
    %v1278 = vadd.f32 %v1247, %v1254
    %v1279 = vadd.f32 %v1248, %v1254
    %v1280 = vadd.f32 %v1249, %v1254
    %v1281 = vadd.f32 %v1250, %v1254
    %v1282 = vmax.f32 %v1256, 0.0
    %v1283 = vmax.f32 %v1257, 0.0
    %v1284 = vmax.f32 %v1258, 0.0
    %v1285 = vmax.f32 %v1259, 0.0
    %v1286 = vmax.f32 %v1260, 0.0
    %v1287 = vmax.f32 %v1261, 0.0
    %v1288 = vmax.f32 %v1262, 0.0
    %v1289 = vmax.f32 %v1263, 0.0
    %v1290 = vmax.f32 %v1264, 0.0
    %v1291 = vmax.f32 %v1265, 0.0
    %v1292 = vmax.f32 %v1266, 0.0
    %v1293 = vmax.f32 %v1267, 0.0
    %v1294 = vmax.f32 %v1268, 0.0
    %v1295 = vmax.f32 %v1269, 0.0
    %v1296 = vmax.f32 %v1270, 0.0
    %v1297 = vmax.f32 %v1271, 0.0
    %v1298 = vmax.f32 %v1272, 0.0
    %v1299 = vmax.f32 %v1273, 0.0
    %v1300 = vmax.f32 %v1274, 0.0
    %v1301 = vmax.f32 %v1275, 0.0
    %v1302 = vmax.f32 %v1276, 0.0
    %v1303 = vmax.f32 %v1277, 0.0
    %v1304 = vmax.f32 %v1278, 0.0
    %v1305 = vmax.f32 %v1279, 0.0
    %v1306 = vmax.f32 %v1280, 0.0
    %v1307 = vmax.f32 %v1281, 0.0
    %s1308 = scalar_lea.vmem [#allocation5], 512
    %v1309 = vld [vmem:[%s1308] sm:$0xff]
    %v1310 = vld [vmem:[%s1308 + $0x8] sm:$0xff]
    %v1311 = vld [vmem:[%s1308 + $0x10] sm:$0xff]
    %v1312 = vld [vmem:[%s1308 + $0x18] sm:$0xff]
    %v1313 = vld [vmem:[%s1308 + $0x20] sm:$0xff]
    %v1314 = vld [vmem:[%s1308 + $0x28] sm:$0xff]
    %v1315 = vld [vmem:[%s1308 + $0x30] sm:$0xff]
    %v1316 = vld [vmem:[%s1308 + $0x38] sm:$0xff]
    %v1317 = vld [vmem:[%s1308 + $0x40] sm:$0xff]
    %v1318 = vld [vmem:[%s1308 + $0x48] sm:$0xff]
    %v1319 = vld [vmem:[%s1308 + $0x50] sm:$0xff]
    %v1320 = vld [vmem:[%s1308 + $0x58] sm:$0xff]
    %v1321 = vld [vmem:[%s1308 + $0x60] sm:$0xff]
    %v1322 = vld [vmem:[%s1308 + $0x68] sm:$0xff]
    %v1323 = vld [vmem:[%s1308 + $0x70] sm:$0xff]
    %v1324 = vld [vmem:[%s1308 + $0x78] sm:$0xff]
    %s1325 = scalar_lea.vmem [#allocation7], 4
    %v1326 = vld [vmem:[%s1325] sm:$0x1]
    %v1328 = vperm.slane %v1326, 0
    %1330 = vmatpush.msra.mxu0 %v1324
    %1331 = vmatpush.msra.mxu0 %v1323
    %1332 = vmatpush.msra.mxu0 %v1322
    %1333 = vmatpush.msra.mxu0 %v1321
    %1334 = vmatpush.msra.mxu0 %v1320
    %1335 = vmatpush.msra.mxu0 %v1319
    %1336 = vmatpush.msra.mxu0 %v1318
    %1337 = vmatpush.msra.mxu0 %v1317
    %1338 = vmatpush.msra.mxu0 %v1316
    %1339 = vmatpush.msra.mxu0 %v1315
    %1340 = vmatpush.msra.mxu0 %v1314
    %1341 = vmatpush.msra.mxu0 %v1313
    %1342 = vmatpush.msra.mxu0 %v1312
    %1343 = vmatpush.msra.mxu0 %v1311
    %1344 = vmatpush.msra.mxu0 %v1310
    %1345 = vmatpush.msra.mxu0 %v1309
    %1346 = vmatmul.f32.gmra.mxu0 %v1282
    %v1347 = vpop.f32.mrf.mxu0
    %v1348 = vadd.f32 %v1328, %v1347
    %1349 = vmatmul.f32.gmra.mxu0 %v1283
    %v1350 = vpop.f32.mrf.mxu0
    %v1351 = vadd.f32 %v1328, %v1350
    %1352 = vmatmul.f32.gmra.mxu0 %v1284
    %v1353 = vpop.f32.mrf.mxu0
    %v1354 = vadd.f32 %v1328, %v1353
    %1355 = vmatmul.f32.gmra.mxu0 %v1285
    %v1356 = vpop.f32.mrf.mxu0
    %v1357 = vadd.f32 %v1328, %v1356
    %1358 = vmatmul.f32.gmra.mxu0 %v1286
    %v1359 = vpop.f32.mrf.mxu0
    %v1360 = vadd.f32 %v1328, %v1359
    %1361 = vmatmul.f32.gmra.mxu0 %v1287
    %v1362 = vpop.f32.mrf.mxu0
    %v1363 = vadd.f32 %v1328, %v1362
    %1364 = vmatmul.f32.gmra.mxu0 %v1288
    %v1365 = vpop.f32.mrf.mxu0
    %v1366 = vadd.f32 %v1328, %v1365
    %1367 = vmatmul.f32.gmra.mxu0 %v1289
    %v1368 = vpop.f32.mrf.mxu0
    %v1369 = vadd.f32 %v1328, %v1368
    %1370 = vmatmul.f32.gmra.mxu0 %v1290
    %v1371 = vpop.f32.mrf.mxu0
    %v1372 = vadd.f32 %v1328, %v1371
    %1373 = vmatmul.f32.gmra.mxu0 %v1291
    %v1374 = vpop.f32.mrf.mxu0
    %v1375 = vadd.f32 %v1328, %v1374
    %1376 = vmatmul.f32.gmra.mxu0 %v1292
    %v1377 = vpop.f32.mrf.mxu0
    %v1378 = vadd.f32 %v1328, %v1377
    %1379 = vmatmul.f32.gmra.mxu0 %v1293
    %v1380 = vpop.f32.mrf.mxu0
    %v1381 = vadd.f32 %v1328, %v1380
    %1382 = vmatmul.f32.gmra.mxu0 %v1294
    %v1383 = vpop.f32.mrf.mxu0
    %v1384 = vadd.f32 %v1328, %v1383
    %1385 = vmatmul.f32.gmra.mxu0 %v1295
    %v1386 = vpop.f32.mrf.mxu0
    %v1387 = vadd.f32 %v1328, %v1386
    %1388 = vmatmul.f32.gmra.mxu0 %v1296
    %v1389 = vpop.f32.mrf.mxu0
    %v1390 = vadd.f32 %v1328, %v1389
    %1391 = vmatmul.f32.gmra.mxu0 %v1297
    %v1392 = vpop.f32.mrf.mxu0
    %v1393 = vadd.f32 %v1328, %v1392
    %1394 = vmatmul.f32.gmra.mxu0 %v1298
    %v1395 = vpop.f32.mrf.mxu0
    %v1396 = vadd.f32 %v1328, %v1395
    %1397 = vmatmul.f32.gmra.mxu0 %v1299
    %v1398 = vpop.f32.mrf.mxu0
    %v1399 = vadd.f32 %v1328, %v1398
    %1400 = vmatmul.f32.gmra.mxu0 %v1300
    %v1401 = vpop.f32.mrf.mxu0
    %v1402 = vadd.f32 %v1328, %v1401
    %1403 = vmatmul.f32.gmra.mxu0 %v1301
    %v1404 = vpop.f32.mrf.mxu0
    %v1405 = vadd.f32 %v1328, %v1404
    %1406 = vmatmul.f32.gmra.mxu0 %v1302
    %v1407 = vpop.f32.mrf.mxu0
    %v1408 = vadd.f32 %v1328, %v1407
    %1409 = vmatmul.f32.gmra.mxu0 %v1303
    %v1410 = vpop.f32.mrf.mxu0
    %v1411 = vadd.f32 %v1328, %v1410
    %1412 = vmatmul.f32.gmra.mxu0 %v1304
    %v1413 = vpop.f32.mrf.mxu0
    %v1414 = vadd.f32 %v1328, %v1413
    %1415 = vmatmul.f32.gmra.mxu0 %v1305
    %v1416 = vpop.f32.mrf.mxu0
    %v1417 = vadd.f32 %v1328, %v1416
    %1418 = vmatmul.f32.gmra.mxu0 %v1306
    %v1419 = vpop.f32.mrf.mxu0
    %v1420 = vadd.f32 %v1328, %v1419
    %1421 = vmatmul.f32.gmra.mxu0 %v1307
    %v1422 = vpop.f32.mrf.mxu0
    %v1423 = vadd.f32 %v1328, %v1422
    %1424 = vdwg.mxu0
    %s1425 = scalar_lea.vmem [#allocation5], 640
    %v1426 = vld [vmem:[%s1425] sm:$0xff]
    %v1427 = vld [vmem:[%s1425 + $0x8] sm:$0xff]
    %v1428 = vld [vmem:[%s1425 + $0x10] sm:$0xff]
    %v1429 = vld [vmem:[%s1425 + $0x18] sm:$0xff]
    %v1430 = vld [vmem:[%s1425 + $0x20] sm:$0xff]
    %v1431 = vld [vmem:[%s1425 + $0x28] sm:$0xff]
    %v1432 = vld [vmem:[%s1425 + $0x30] sm:$0xff]
    %v1433 = vld [vmem:[%s1425 + $0x38] sm:$0xff]
    %v1434 = vld [vmem:[%s1425 + $0x40] sm:$0xff]
    %v1435 = vld [vmem:[%s1425 + $0x48] sm:$0xff]
    %v1436 = vld [vmem:[%s1425 + $0x50] sm:$0xff]
    %v1437 = vld [vmem:[%s1425 + $0x58] sm:$0xff]
    %v1438 = vld [vmem:[%s1425 + $0x60] sm:$0xff]
    %v1439 = vld [vmem:[%s1425 + $0x68] sm:$0xff]
    %v1440 = vld [vmem:[%s1425 + $0x70] sm:$0xff]
    %v1441 = vld [vmem:[%s1425 + $0x78] sm:$0xff]
    %s1442 = scalar_lea.vmem [#allocation7], 5
    %v1443 = vld [vmem:[%s1442] sm:$0x1]
    %v1445 = vperm.slane %v1443, 0
    %1447 = vmatpush.msra.mxu0 %v1441
    %1448 = vmatpush.msra.mxu0 %v1440
    %1449 = vmatpush.msra.mxu0 %v1439
    %1450 = vmatpush.msra.mxu0 %v1438
    %1451 = vmatpush.msra.mxu0 %v1437
    %1452 = vmatpush.msra.mxu0 %v1436
    %1453 = vmatpush.msra.mxu0 %v1435
    %1454 = vmatpush.msra.mxu0 %v1434
    %1455 = vmatpush.msra.mxu0 %v1433
    %1456 = vmatpush.msra.mxu0 %v1432
    %1457 = vmatpush.msra.mxu0 %v1431
    %1458 = vmatpush.msra.mxu0 %v1430
    %1459 = vmatpush.msra.mxu0 %v1429
    %1460 = vmatpush.msra.mxu0 %v1428
    %1461 = vmatpush.msra.mxu0 %v1427
    %1462 = vmatpush.msra.mxu0 %v1426
    %1463 = vmatmul.f32.gmra.mxu0 %v1348
    %v1464 = vpop.f32.mrf.mxu0
    %v1465 = vadd.f32 %v1445, %v1464
    %1466 = vmatmul.f32.gmra.mxu0 %v1351
    %v1467 = vpop.f32.mrf.mxu0
    %v1468 = vadd.f32 %v1445, %v1467
    %1469 = vmatmul.f32.gmra.mxu0 %v1354
    %v1470 = vpop.f32.mrf.mxu0
    %v1471 = vadd.f32 %v1445, %v1470
    %1472 = vmatmul.f32.gmra.mxu0 %v1357
    %v1473 = vpop.f32.mrf.mxu0
    %v1474 = vadd.f32 %v1445, %v1473
    %1475 = vmatmul.f32.gmra.mxu0 %v1360
    %v1476 = vpop.f32.mrf.mxu0
    %v1477 = vadd.f32 %v1445, %v1476
    %1478 = vmatmul.f32.gmra.mxu0 %v1363
    %v1479 = vpop.f32.mrf.mxu0
    %v1480 = vadd.f32 %v1445, %v1479
    %1481 = vmatmul.f32.gmra.mxu0 %v1366
    %v1482 = vpop.f32.mrf.mxu0
    %v1483 = vadd.f32 %v1445, %v1482
    %1484 = vmatmul.f32.gmra.mxu0 %v1369
    %v1485 = vpop.f32.mrf.mxu0
    %v1486 = vadd.f32 %v1445, %v1485
    %1487 = vmatmul.f32.gmra.mxu0 %v1372
    %v1488 = vpop.f32.mrf.mxu0
    %v1489 = vadd.f32 %v1445, %v1488
    %1490 = vmatmul.f32.gmra.mxu0 %v1375
    %v1491 = vpop.f32.mrf.mxu0
    %v1492 = vadd.f32 %v1445, %v1491
    %1493 = vmatmul.f32.gmra.mxu0 %v1378
    %v1494 = vpop.f32.mrf.mxu0
    %v1495 = vadd.f32 %v1445, %v1494
    %1496 = vmatmul.f32.gmra.mxu0 %v1381
    %v1497 = vpop.f32.mrf.mxu0
    %v1498 = vadd.f32 %v1445, %v1497
    %1499 = vmatmul.f32.gmra.mxu0 %v1384
    %v1500 = vpop.f32.mrf.mxu0
    %v1501 = vadd.f32 %v1445, %v1500
    %1502 = vmatmul.f32.gmra.mxu0 %v1387
    %v1503 = vpop.f32.mrf.mxu0
    %v1504 = vadd.f32 %v1445, %v1503
    %1505 = vmatmul.f32.gmra.mxu0 %v1390
    %v1506 = vpop.f32.mrf.mxu0
    %v1507 = vadd.f32 %v1445, %v1506
    %1508 = vmatmul.f32.gmra.mxu0 %v1393
    %v1509 = vpop.f32.mrf.mxu0
    %v1510 = vadd.f32 %v1445, %v1509
    %1511 = vmatmul.f32.gmra.mxu0 %v1396
    %v1512 = vpop.f32.mrf.mxu0
    %v1513 = vadd.f32 %v1445, %v1512
    %1514 = vmatmul.f32.gmra.mxu0 %v1399
    %v1515 = vpop.f32.mrf.mxu0
    %v1516 = vadd.f32 %v1445, %v1515
    %1517 = vmatmul.f32.gmra.mxu0 %v1402
    %v1518 = vpop.f32.mrf.mxu0
    %v1519 = vadd.f32 %v1445, %v1518
    %1520 = vmatmul.f32.gmra.mxu0 %v1405
    %v1521 = vpop.f32.mrf.mxu0
    %v1522 = vadd.f32 %v1445, %v1521
    %1523 = vmatmul.f32.gmra.mxu0 %v1408
    %v1524 = vpop.f32.mrf.mxu0
    %v1525 = vadd.f32 %v1445, %v1524
    %1526 = vmatmul.f32.gmra.mxu0 %v1411
    %v1527 = vpop.f32.mrf.mxu0
    %v1528 = vadd.f32 %v1445, %v1527
    %1529 = vmatmul.f32.gmra.mxu0 %v1414
    %v1530 = vpop.f32.mrf.mxu0
    %v1531 = vadd.f32 %v1445, %v1530
    %1532 = vmatmul.f32.gmra.mxu0 %v1417
    %v1533 = vpop.f32.mrf.mxu0
    %v1534 = vadd.f32 %v1445, %v1533
    %1535 = vmatmul.f32.gmra.mxu0 %v1420
    %v1536 = vpop.f32.mrf.mxu0
    %v1537 = vadd.f32 %v1445, %v1536
    %1538 = vmatmul.f32.gmra.mxu0 %v1423
    %v1539 = vpop.f32.mrf.mxu0
    %v1540 = vadd.f32 %v1445, %v1539
    %1541 = vdwg.mxu0
    %v1542 = vmax.f32 %v1465, 0.0
    %v1543 = vmax.f32 %v1468, 0.0
    %v1544 = vmax.f32 %v1471, 0.0
    %v1545 = vmax.f32 %v1474, 0.0
    %v1546 = vmax.f32 %v1477, 0.0
    %v1547 = vmax.f32 %v1480, 0.0
    %v1548 = vmax.f32 %v1483, 0.0
    %v1549 = vmax.f32 %v1486, 0.0
    %v1550 = vmax.f32 %v1489, 0.0
    %v1551 = vmax.f32 %v1492, 0.0
    %v1552 = vmax.f32 %v1495, 0.0
    %v1553 = vmax.f32 %v1498, 0.0
    %v1554 = vmax.f32 %v1501, 0.0
    %v1555 = vmax.f32 %v1504, 0.0
    %v1556 = vmax.f32 %v1507, 0.0
    %v1557 = vmax.f32 %v1510, 0.0
    %v1558 = vmax.f32 %v1513, 0.0
    %v1559 = vmax.f32 %v1516, 0.0
    %v1560 = vmax.f32 %v1519, 0.0
    %v1561 = vmax.f32 %v1522, 0.0
    %v1562 = vmax.f32 %v1525, 0.0
    %v1563 = vmax.f32 %v1528, 0.0
    %v1564 = vmax.f32 %v1531, 0.0
    %v1565 = vmax.f32 %v1534, 0.0
    %v1566 = vmax.f32 %v1537, 0.0
    %v1567 = vmax.f32 %v1540, 0.0
    %s1568 = scalar_lea.vmem [#allocation5], 768
    %v1569 = vld [vmem:[%s1568] sm:$0xff]
    %v1570 = vld [vmem:[%s1568 + $0x8] sm:$0xff]
    %v1571 = vld [vmem:[%s1568 + $0x10] sm:$0xff]
    %v1572 = vld [vmem:[%s1568 + $0x18] sm:$0xff]
    %v1573 = vld [vmem:[%s1568 + $0x20] sm:$0xff]
    %v1574 = vld [vmem:[%s1568 + $0x28] sm:$0xff]
    %v1575 = vld [vmem:[%s1568 + $0x30] sm:$0xff]
    %v1576 = vld [vmem:[%s1568 + $0x38] sm:$0xff]
    %v1577 = vld [vmem:[%s1568 + $0x40] sm:$0xff]
    %v1578 = vld [vmem:[%s1568 + $0x48] sm:$0xff]
    %v1579 = vld [vmem:[%s1568 + $0x50] sm:$0xff]
    %v1580 = vld [vmem:[%s1568 + $0x58] sm:$0xff]
    %v1581 = vld [vmem:[%s1568 + $0x60] sm:$0xff]
    %v1582 = vld [vmem:[%s1568 + $0x68] sm:$0xff]
    %v1583 = vld [vmem:[%s1568 + $0x70] sm:$0xff]
    %v1584 = vld [vmem:[%s1568 + $0x78] sm:$0xff]
    %s1585 = scalar_lea.vmem [#allocation7], 6
    %v1586 = vld [vmem:[%s1585] sm:$0x1]
    %v1588 = vperm.slane %v1586, 0
    %1590 = vmatpush.msra.mxu0 %v1584
    %1591 = vmatpush.msra.mxu0 %v1583
    %1592 = vmatpush.msra.mxu0 %v1582
    %1593 = vmatpush.msra.mxu0 %v1581
    %1594 = vmatpush.msra.mxu0 %v1580
    %1595 = vmatpush.msra.mxu0 %v1579
    %1596 = vmatpush.msra.mxu0 %v1578
    %1597 = vmatpush.msra.mxu0 %v1577
    %1598 = vmatpush.msra.mxu0 %v1576
    %1599 = vmatpush.msra.mxu0 %v1575
    %1600 = vmatpush.msra.mxu0 %v1574
    %1601 = vmatpush.msra.mxu0 %v1573
    %1602 = vmatpush.msra.mxu0 %v1572
    %1603 = vmatpush.msra.mxu0 %v1571
    %1604 = vmatpush.msra.mxu0 %v1570
    %1605 = vmatpush.msra.mxu0 %v1569
    %1606 = vmatmul.f32.gmra.mxu0 %v1542
    %v1607 = vpop.f32.mrf.mxu0
    %v1608 = vadd.f32 %v1588, %v1607
    %1609 = vmatmul.f32.gmra.mxu0 %v1543
    %v1610 = vpop.f32.mrf.mxu0
    %v1611 = vadd.f32 %v1588, %v1610
    %1612 = vmatmul.f32.gmra.mxu0 %v1544
    %v1613 = vpop.f32.mrf.mxu0
    %v1614 = vadd.f32 %v1588, %v1613
    %1615 = vmatmul.f32.gmra.mxu0 %v1545
    %v1616 = vpop.f32.mrf.mxu0
    %v1617 = vadd.f32 %v1588, %v1616
    %1618 = vmatmul.f32.gmra.mxu0 %v1546
    %v1619 = vpop.f32.mrf.mxu0
    %v1620 = vadd.f32 %v1588, %v1619
    %1621 = vmatmul.f32.gmra.mxu0 %v1547
    %v1622 = vpop.f32.mrf.mxu0
    %v1623 = vadd.f32 %v1588, %v1622
    %1624 = vmatmul.f32.gmra.mxu0 %v1548
    %v1625 = vpop.f32.mrf.mxu0
    %v1626 = vadd.f32 %v1588, %v1625
    %1627 = vmatmul.f32.gmra.mxu0 %v1549
    %v1628 = vpop.f32.mrf.mxu0
    %v1629 = vadd.f32 %v1588, %v1628
    %1630 = vmatmul.f32.gmra.mxu0 %v1550
    %v1631 = vpop.f32.mrf.mxu0
    %v1632 = vadd.f32 %v1588, %v1631
    %1633 = vmatmul.f32.gmra.mxu0 %v1551
    %v1634 = vpop.f32.mrf.mxu0
    %v1635 = vadd.f32 %v1588, %v1634
    %1636 = vmatmul.f32.gmra.mxu0 %v1552
    %v1637 = vpop.f32.mrf.mxu0
    %v1638 = vadd.f32 %v1588, %v1637
    %1639 = vmatmul.f32.gmra.mxu0 %v1553
    %v1640 = vpop.f32.mrf.mxu0
    %v1641 = vadd.f32 %v1588, %v1640
    %1642 = vmatmul.f32.gmra.mxu0 %v1554
    %v1643 = vpop.f32.mrf.mxu0
    %v1644 = vadd.f32 %v1588, %v1643
    %1645 = vmatmul.f32.gmra.mxu0 %v1555
    %v1646 = vpop.f32.mrf.mxu0
    %v1647 = vadd.f32 %v1588, %v1646
    %1648 = vmatmul.f32.gmra.mxu0 %v1556
    %v1649 = vpop.f32.mrf.mxu0
    %v1650 = vadd.f32 %v1588, %v1649
    %1651 = vmatmul.f32.gmra.mxu0 %v1557
    %v1652 = vpop.f32.mrf.mxu0
    %v1653 = vadd.f32 %v1588, %v1652
    %1654 = vmatmul.f32.gmra.mxu0 %v1558
    %v1655 = vpop.f32.mrf.mxu0
    %v1656 = vadd.f32 %v1588, %v1655
    %1657 = vmatmul.f32.gmra.mxu0 %v1559
    %v1658 = vpop.f32.mrf.mxu0
    %v1659 = vadd.f32 %v1588, %v1658
    %1660 = vmatmul.f32.gmra.mxu0 %v1560
    %v1661 = vpop.f32.mrf.mxu0
    %v1662 = vadd.f32 %v1588, %v1661
    %1663 = vmatmul.f32.gmra.mxu0 %v1561
    %v1664 = vpop.f32.mrf.mxu0
    %v1665 = vadd.f32 %v1588, %v1664
    %1666 = vmatmul.f32.gmra.mxu0 %v1562
    %v1667 = vpop.f32.mrf.mxu0
    %v1668 = vadd.f32 %v1588, %v1667
    %1669 = vmatmul.f32.gmra.mxu0 %v1563
    %v1670 = vpop.f32.mrf.mxu0
    %v1671 = vadd.f32 %v1588, %v1670
    %1672 = vmatmul.f32.gmra.mxu0 %v1564
    %v1673 = vpop.f32.mrf.mxu0
    %v1674 = vadd.f32 %v1588, %v1673
    %1675 = vmatmul.f32.gmra.mxu0 %v1565
    %v1676 = vpop.f32.mrf.mxu0
    %v1677 = vadd.f32 %v1588, %v1676
    %1678 = vmatmul.f32.gmra.mxu0 %v1566
    %v1679 = vpop.f32.mrf.mxu0
    %v1680 = vadd.f32 %v1588, %v1679
    %1681 = vmatmul.f32.gmra.mxu0 %v1567
    %v1682 = vpop.f32.mrf.mxu0
    %v1683 = vadd.f32 %v1588, %v1682
    %1684 = vdwg.mxu0
    %1685 = vst [vmem:[#allocation11] sm:$0xff] %v1608
    %1686 = vst [vmem:[#allocation11 + $0x8] sm:$0xff] %v1611
    %1687 = vst [vmem:[#allocation11 + $0x10] sm:$0xff] %v1614
    %1688 = vst [vmem:[#allocation11 + $0x18] sm:$0xff] %v1617
    %1689 = vst [vmem:[#allocation11 + $0x20] sm:$0xff] %v1620
    %1690 = vst [vmem:[#allocation11 + $0x28] sm:$0xff] %v1623
    %1691 = vst [vmem:[#allocation11 + $0x30] sm:$0xff] %v1626
    %1692 = vst [vmem:[#allocation11 + $0x38] sm:$0xff] %v1629
    %1693 = vst [vmem:[#allocation11 + $0x40] sm:$0xff] %v1632
    %1694 = vst [vmem:[#allocation11 + $0x48] sm:$0xff] %v1635
    %1695 = vst [vmem:[#allocation11 + $0x50] sm:$0xff] %v1638
    %1696 = vst [vmem:[#allocation11 + $0x58] sm:$0xff] %v1641
    %1697 = vst [vmem:[#allocation11 + $0x60] sm:$0xff] %v1644
    %1698 = vst [vmem:[#allocation11 + $0x68] sm:$0xff] %v1647
    %1699 = vst [vmem:[#allocation11 + $0x70] sm:$0xff] %v1650
    %1700 = vst [vmem:[#allocation11 + $0x78] sm:$0xff] %v1653
    %1701 = vst [vmem:[#allocation11 + $0x80] sm:$0xff] %v1656
    %1702 = vst [vmem:[#allocation11 + $0x88] sm:$0xff] %v1659
    %1703 = vst [vmem:[#allocation11 + $0x90] sm:$0xff] %v1662
    %1704 = vst [vmem:[#allocation11 + $0x98] sm:$0xff] %v1665
    %1705 = vst [vmem:[#allocation11 + $0xa0] sm:$0xff] %v1668
    %1706 = vst [vmem:[#allocation11 + $0xa8] sm:$0xff] %v1671
    %1707 = vst [vmem:[#allocation11 + $0xb0] sm:$0xff] %v1674
    %1708 = vst [vmem:[#allocation11 + $0xb8] sm:$0xff] %v1677
    %1709 = vst [vmem:[#allocation11 + $0xc0] sm:$0xff] %v1680
    %1710 = vst [vmem:[#allocation11 + $0xc8] sm:$0xff] %v1683
    // Predicated region
    $region42: #{tpu_custom_call.1} parent=1 // pred_check
      _
    $region43: #{tpu_custom_call.1} parent=1 // pred_check_branch
      %1712 = sbr.rel (0) target = $region45
    $region44: #{tpu_custom_call.1} parent=1 // pred_region
      %1714 = vsyncadd [#allocation4], 0
      %s1715 = sshll.u32 [#allocation11], 4
      %s1716 = int_to_ptr.vmem [resolvable:$true] %s1715
      %s1717 = sshll.u32 %s5, 4
      %s1718 = int_to_ptr.hbm [resolvable:$true] %s1717
      %1723 = dma.vmem_to_hbm [thread:$0]  %s1716, 3328, %s1718, [#allocation4], 128, 128, 8
    $region45: #{tpu_custom_call.1} parent=1 // pred_fallthru
      _
    // Predicated region
    $region46: #{tpu_custom_call.1} parent=1 // pred_check
      _
    $region47: #{tpu_custom_call.1} parent=1 // pred_check_branch
      %1725 = sbr.rel (0) target = $region49
    $region48: #{tpu_custom_call.1} parent=1 // pred_region
      %1727 = dma.done [#allocation4], 3328
    $region49: #{tpu_custom_call.1} parent=1 // pred_fallthru
      _
    %1728 = vsyncpa [#allocation3], 1
    %1729 = vsyncpa [#allocation6], 1
    %1730 = vsyncpa [#allocation9], 1
    %1731 = vsyncpa [#allocation4], 1

</llo_original>
